<compile_context>
chip_gen: v5e
topology: v5e:2x2
jax: 0.10.0
libtpu: 0.0.40
codegen_flags: <defaults>
</compile_context>

<pallas_src>
import jax
import jax.numpy as jnp
from jax.experimental import pallas as pl
from jax.experimental.pallas import tpu as pltpu

IMG_DIM = 1024
HID_DIM = 300
TXT_DIM = 300   # classifier input is 600 = 300 (img feats) + 300 (text feats)
OUT_DIM = 40
OUT_PAD = 128   # lane-dense padded output width (40 -> 128)


def net_kernel(img_ref, txt_ref, w1_ref, b1_ref, w2i_ref, w2t_ref, b2_ref,
               out_ref):
    # fc1: bf16 MXU matmul, f32 accumulate -> (TB, 300) f32
    h = jnp.dot(img_ref[...], w1_ref[...],
                preferred_element_type=jnp.float32)
    h = h + b1_ref[...]                              # f32 bias add (broadcast)

    # classifier on concat([h, txt], axis=1) expressed as a split matmul:
    #   concat([h, txt]) @ W2 == h @ W2[:300] + txt @ W2[300:]
    # (concat at lane offset 300 would need a lane shuffle; split form is two
    #  cheap MXU pushes). Both matmuls use bf16 operands, f32 accumulate.
    h_bf = h.astype(jnp.bfloat16)
    logits = (jnp.dot(h_bf, w2i_ref[...], preferred_element_type=jnp.float32)
              + jnp.dot(txt_ref[...], w2t_ref[...],
                        preferred_element_type=jnp.float32)
              + b2_ref[...])                         # (TB, 128) f32

    x = jnp.maximum(logits, 0.0)                     # relu (f32)

    # log_softmax over the 40 valid lanes; lanes >= OUT_DIM are padding and
    # are masked to a large negative so exp() underflows to 0.
    lane = jax.lax.broadcasted_iota(jnp.int32, x.shape, 1)
    x = jnp.where(lane < OUT_DIM, x, -1e30)
    m = jnp.max(x, axis=-1, keepdims=True)
    shifted = x - m
    lse = jnp.log(jnp.sum(jnp.exp(shifted), axis=-1, keepdims=True))
    out_ref[...] = shifted - lse


def prepare_params(params):
    """One-time preprocessing of nn.Linear params into kernel-ready form.

    Hoisted out of net_forward per review: the w2 img/txt split, the
    40 -> 128 lane zero-pad, the b2 pad and the bf16 casts are done once so
    the per-forward call only moves already-prepared tensors.
    """
    w1, b1, w2, b2 = params
    w1_bf = w1.astype(jnp.bfloat16)                               # (1024, 300)
    b1_f = b1.astype(jnp.float32).reshape(1, HID_DIM)             # (1, 300)
    w2_img = jnp.pad(w2[:HID_DIM, :].astype(jnp.bfloat16),
                     ((0, 0), (0, OUT_PAD - OUT_DIM)))            # (300, 128)
    w2_txt = jnp.pad(w2[HID_DIM:, :].astype(jnp.bfloat16),
                     ((0, 0), (0, OUT_PAD - OUT_DIM)))            # (300, 128)
    b2_pad = jnp.pad(b2.astype(jnp.float32).reshape(1, OUT_DIM),
                     ((0, 0), (0, OUT_PAD - OUT_DIM)))            # (1, 128)
    return w1_bf, b1_f, w2_img, w2_txt, b2_pad


def net_forward(img_features, text_features, prepped, *, max_batch_tile=256):
    """Forward pass. `prepped` comes from prepare_params (done once)."""
    w1, b1, w2i, w2t, b2 = prepped
    B = img_features.shape[0]

    # Pad batch to a multiple of 16 (bf16 sublane packing), pick a batch tile
    # that is a multiple of 16, and round the padded batch up to the tile.
    b_pad = ((B + 15) // 16) * 16
    tb = min(max_batch_tile, b_pad)
    b_pad = ((b_pad + tb - 1) // tb) * tb
    n_tiles = b_pad // tb

    img = img_features.astype(jnp.bfloat16)
    txt = text_features.astype(jnp.bfloat16)
    if b_pad != B:
        img = jnp.pad(img, ((0, b_pad - B), (0, 0)))
        txt = jnp.pad(txt, ((0, b_pad - B), (0, 0)))

    bytes_accessed = (w1.size * 2 + w2i.size * 2 + w2t.size * 2   # bf16 weights
                      + b1.size * 4 + b2.size * 4                 # f32 biases
                      + img.size * 2 + txt.size * 2               # bf16 acts
                      + b_pad * OUT_PAD * 4)                      # f32 output
    cost = pl.CostEstimate(
        flops=(2 * b_pad * IMG_DIM * HID_DIM
               + 2 * b_pad * (HID_DIM + TXT_DIM) * OUT_PAD),
        transcendentals=b_pad * (OUT_PAD + 1),
        bytes_accessed=bytes_accessed)

    grid_spec = pltpu.PrefetchScalarGridSpec(
        num_scalar_prefetch=0,
        grid=(n_tiles,),
        in_specs=[
            # Batch-tiled activations: double-buffered across grid steps.
            pl.BlockSpec((tb, IMG_DIM), lambda i: (i, 0)),
            pl.BlockSpec((tb, TXT_DIM), lambda i: (i, 0)),
            # Weights / biases: constant block index -> stay VMEM-resident.
            pl.BlockSpec((IMG_DIM, HID_DIM), lambda i: (0, 0)),
            pl.BlockSpec((1, HID_DIM), lambda i: (0, 0)),
            pl.BlockSpec((HID_DIM, OUT_PAD), lambda i: (0, 0)),
            pl.BlockSpec((TXT_DIM, OUT_PAD), lambda i: (0, 0)),
            pl.BlockSpec((1, OUT_PAD), lambda i: (0, 0)),
        ],
        out_specs=pl.BlockSpec((tb, OUT_PAD), lambda i: (i, 0)),
    )

    out_pad = pl.pallas_call(
        net_kernel,
        out_shape=jax.ShapeDtypeStruct((b_pad, OUT_PAD), jnp.float32),
        grid_spec=grid_spec,
        compiler_params=pltpu.CompilerParams(
            dimension_semantics=("parallel",)),   # lets v7x use both TCs
        cost_estimate=cost,
    )(img, txt, w1, b1, w2i, w2t, b2)

    # TODO(synk): if this forward runs repeatedly at small batch, start the
    # w1/w2-half DMAs in a prior pallas_call and consume (SEMAPHORE, VMEM)
    # futures here (P10) so the ~0.8 MB of weights stays resident across calls.
    return out_pad[:B, :OUT_DIM]


def init_params(key):
    """Deterministic params matching the nn.Linear shapes.

    Weights are stored as [in_features, out_features] (transpose of PyTorch's
    [out, in]) so the kernel uses plain matmuls; matmul operands are bf16
    (the kernel accumulates in f32), biases stay f32 for the epilogue.
    """
    k1, k2, k3, k4 = jax.random.split(key, 4)
    s1 = 1.0 / jnp.sqrt(IMG_DIM)
    s2 = 1.0 / jnp.sqrt(HID_DIM + TXT_DIM)
    w1 = jax.random.uniform(k1, (IMG_DIM, HID_DIM), jnp.float32,
                            -s1, s1).astype(jnp.bfloat16)
    b1 = jax.random.uniform(k2, (1, HID_DIM), jnp.float32, -s1, s1)
    w2 = jax.random.uniform(k3, (HID_DIM + TXT_DIM, OUT_DIM), jnp.float32,
                            -s2, s2).astype(jnp.bfloat16)
    b2 = jax.random.uniform(k4, (1, OUT_DIM), jnp.float32, -s2, s2)
    return w1, b1, w2, b2


def reference_forward(img_features, text_features, params):
    """Pure-JAX reference using the same bf16-rounded MXU operands as the
    kernel, so the comparison isolates kernel bugs rather than bf16 rounding."""
    w1, b1, w2, b2 = params
    img = img_features.astype(jnp.bfloat16).astype(jnp.float32)
    txt = text_features.astype(jnp.bfloat16).astype(jnp.float32)
    w1f = w1.astype(jnp.float32)
    w2f = w2.astype(jnp.float32)
    h = img @ w1f + b1
    h = h.astype(jnp.bfloat16).astype(jnp.float32)   # kernel feeds h as bf16
    tot = jnp.concatenate([h, txt], axis=1)
    x = jnp.maximum(tot @ w2f + b2, 0.0)
    return jax.nn.log_softmax(x, axis=1)


if __name__ == "__main__":
    key = jax.random.PRNGKey(0)
    kp, ki, kt = jax.random.split(key, 3)

    B = 2
    img = jax.random.normal(ki, (B, IMG_DIM), jnp.float32)
    txt = jax.random.normal(kt, (B, TXT_DIM), jnp.float32)
    params = init_params(kp)
    prepped = prepare_params(params)    # one-time weight prep (hoisted)

    out = net_forward(img, txt, prepped)
    out = jax.block_until_ready(out)

    ref = reference_forward(img, txt, params)
    assert out.shape == (B, OUT_DIM)
    assert bool(jnp.allclose(out, ref, atol=2e-4, rtol=2e-4)), (
        f"max abs err {jnp.max(jnp.abs(out - ref))}")

    print("KERNEL_OK")
</pallas_src>

<mosaic_0001>
module attributes {stable_mosaic.version = 11 : i64} {
  func.func @net_kernel(%arg0: i32, %arg1: memref<16x1024xbf16, #tpu.memory_space<vmem>>, %arg2: memref<16x300xbf16, #tpu.memory_space<vmem>>, %arg3: memref<1024x300xbf16, #tpu.memory_space<vmem>>, %arg4: memref<1x300xf32, #tpu.memory_space<vmem>>, %arg5: memref<300x128xbf16, #tpu.memory_space<vmem>>, %arg6: memref<300x128xbf16, #tpu.memory_space<vmem>>, %arg7: memref<1x128xf32, #tpu.memory_space<vmem>>, %arg8: memref<16x128xf32, #tpu.memory_space<vmem>>) attributes {dimension_semantics = [#tpu.dimension_semantics<parallel>], iteration_bounds = array<i64: 1>, scalar_prefetch = 0 : i64, scratch_operands = 0 : i64, tpu.core_type = #tpu.core_type<tc>, window_params = [{transform_indices = @transform_0, window_bounds = array<i64: 16, 1024>}, {transform_indices = @transform_1, window_bounds = array<i64: 16, 300>}, {pipeline_mode = #tpu.pipeline_mode<synchronous>, transform_indices = @transform_2, window_bounds = array<i64: 1024, 300>}, {pipeline_mode = #tpu.pipeline_mode<synchronous>, transform_indices = @transform_3, window_bounds = array<i64: 1, 300>}, {pipeline_mode = #tpu.pipeline_mode<synchronous>, transform_indices = @transform_4, window_bounds = array<i64: 300, 128>}, {pipeline_mode = #tpu.pipeline_mode<synchronous>, transform_indices = @transform_5, window_bounds = array<i64: 300, 128>}, {pipeline_mode = #tpu.pipeline_mode<synchronous>, transform_indices = @transform_6, window_bounds = array<i64: 1, 128>}, {transform_indices = @transform_7, window_bounds = array<i64: 16, 128>}]} {
    %c0 = arith.constant 0 : index
    %c0_0 = arith.constant 0 : index
    %0 = vector.load %arg1[%c0, %c0_0] : memref<16x1024xbf16, #tpu.memory_space<vmem>>, vector<16x1024xbf16>
    %c0_1 = arith.constant 0 : index
    %c0_2 = arith.constant 0 : index
    %1 = vector.load %arg3[%c0_1, %c0_2] : memref<1024x300xbf16, #tpu.memory_space<vmem>>, vector<1024x300xbf16>
    %cst = arith.constant dense<0.000000e+00> : vector<16x300xf32>
    %2 = tpu.matmul %0, %1, %cst {dimension_numbers = #tpu.dot_dimension_numbers<[1], [0], [0], [1], [0, 0, 1, 1], [], []>} : vector<16x1024xbf16>, vector<1024x300xbf16>, vector<16x300xf32> -> vector<16x300xf32>
    %c0_3 = arith.constant 0 : index
    %c0_4 = arith.constant 0 : index
    %3 = vector.load %arg4[%c0_3, %c0_4] : memref<1x300xf32, #tpu.memory_space<vmem>>, vector<1x300xf32>
    %4 = vector.broadcast %3 : vector<1x300xf32> to vector<16x300xf32>
    %5 = arith.addf %2, %4 : vector<16x300xf32>
    %6 = arith.truncf %5 : vector<16x300xf32> to vector<16x300xbf16>
    %c0_5 = arith.constant 0 : index
    %c0_6 = arith.constant 0 : index
    %7 = vector.load %arg5[%c0_5, %c0_6] : memref<300x128xbf16, #tpu.memory_space<vmem>>, vector<300x128xbf16>
    %cst_7 = arith.constant dense<0.000000e+00> : vector<16x128xf32>
    %8 = tpu.matmul %6, %7, %cst_7 {dimension_numbers = #tpu.dot_dimension_numbers<[1], [0], [0], [1], [0, 0, 1, 1], [], []>} : vector<16x300xbf16>, vector<300x128xbf16>, vector<16x128xf32> -> vector<16x128xf32>
    %c0_8 = arith.constant 0 : index
    %c0_9 = arith.constant 0 : index
    %9 = vector.load %arg2[%c0_8, %c0_9] : memref<16x300xbf16, #tpu.memory_space<vmem>>, vector<16x300xbf16>
    %c0_10 = arith.constant 0 : index
    %c0_11 = arith.constant 0 : index
    %10 = vector.load %arg6[%c0_10, %c0_11] : memref<300x128xbf16, #tpu.memory_space<vmem>>, vector<300x128xbf16>
    %cst_12 = arith.constant dense<0.000000e+00> : vector<16x128xf32>
    %11 = tpu.matmul %9, %10, %cst_12 {dimension_numbers = #tpu.dot_dimension_numbers<[1], [0], [0], [1], [0, 0, 1, 1], [], []>} : vector<16x300xbf16>, vector<300x128xbf16>, vector<16x128xf32> -> vector<16x128xf32>
    %12 = arith.addf %8, %11 : vector<16x128xf32>
    %c0_13 = arith.constant 0 : index
    %c0_14 = arith.constant 0 : index
    %13 = vector.load %arg7[%c0_13, %c0_14] : memref<1x128xf32, #tpu.memory_space<vmem>>, vector<1x128xf32>
    %14 = vector.broadcast %13 : vector<1x128xf32> to vector<16x128xf32>
    %15 = arith.addf %12, %14 : vector<16x128xf32>
    %cst_15 = arith.constant 0.000000e+00 : f32
    %16 = vector.broadcast %cst_15 : f32 to vector<16x128xf32>
    %17 = arith.maximumf %15, %16 : vector<16x128xf32>
    %18 = tpu.iota {dimensions = array<i32: 1>} : vector<16x128xi32>
    %c40_i32 = arith.constant 40 : i32
    %19 = vector.broadcast %c40_i32 : i32 to vector<16x128xi32>
    %20 = arith.cmpi slt, %18, %19 : vector<16x128xi32>
    %cst_16 = arith.constant -1.000000e+30 : f32
    %21 = vector.broadcast %cst_16 : f32 to vector<16x128xf32>
    %22 = arith.select %20, %17, %21 : vector<16x128xi1>, vector<16x128xf32>
    %cst_17 = arith.constant dense<0xFF800000> : vector<16xf32>
    %23 = vector.multi_reduction <maximumf>, %22, %cst_17 [1] : vector<16x128xf32> to vector<16xf32>
    %24 = vector.shape_cast %23 : vector<16xf32> to vector<16x1xf32>
    %25 = vector.broadcast %24 : vector<16x1xf32> to vector<16x128xf32>
    %26 = arith.subf %22, %25 : vector<16x128xf32>
    %27 = math.exp %26 : vector<16x128xf32>
    %cst_18 = arith.constant dense<0.000000e+00> : vector<16xf32>
    %28 = vector.multi_reduction <add>, %27, %cst_18 [1] : vector<16x128xf32> to vector<16xf32>
    %29 = vector.shape_cast %28 : vector<16xf32> to vector<16x1xf32>
    %30 = math.log %29 : vector<16x1xf32>
    %31 = vector.broadcast %30 : vector<16x1xf32> to vector<16x128xf32>
    %32 = arith.subf %26, %31 : vector<16x128xf32>
    %c0_19 = arith.constant 0 : index
    %c0_20 = arith.constant 0 : index
    %33 = vector.load %arg8[%c0_19, %c0_20] : memref<16x128xf32, #tpu.memory_space<vmem>>, vector<16x128xf32>
    tpu.vector_store %arg8[%c0_19, %c0_20], %32 {strides = array<i32>} : memref<16x128xf32, #tpu.memory_space<vmem>>, vector<16x128xf32>,
    return
  }
  func.func @transform_0(%arg0: i32) -> (i32, i32) {
    %c0_i32 = arith.constant 0 : i32
    %c0_i32_0 = arith.constant 0 : i32
    return %arg0, %c0_i32 : i32, i32
  }
  func.func @transform_1(%arg0: i32) -> (i32, i32) {
    %c0_i32 = arith.constant 0 : i32
    %c0_i32_0 = arith.constant 0 : i32
    return %arg0, %c0_i32 : i32, i32
  }
  func.func @transform_2(%arg0: i32) -> (i32, i32) {
    %c0_i32 = arith.constant 0 : i32
    %c0_i32_0 = arith.constant 0 : i32
    %c0_i32_1 = arith.constant 0 : i32
    return %c0_i32, %c0_i32_0 : i32, i32
  }
  func.func @transform_3(%arg0: i32) -> (i32, i32) {
    %c0_i32 = arith.constant 0 : i32
    %c0_i32_0 = arith.constant 0 : i32
    %c0_i32_1 = arith.constant 0 : i32
    return %c0_i32, %c0_i32_0 : i32, i32
  }
  func.func @transform_4(%arg0: i32) -> (i32, i32) {
    %c0_i32 = arith.constant 0 : i32
    %c0_i32_0 = arith.constant 0 : i32
    %c0_i32_1 = arith.constant 0 : i32
    return %c0_i32, %c0_i32_0 : i32, i32
  }
  func.func @transform_5(%arg0: i32) -> (i32, i32) {
    %c0_i32 = arith.constant 0 : i32
    %c0_i32_0 = arith.constant 0 : i32
    %c0_i32_1 = arith.constant 0 : i32
    return %c0_i32, %c0_i32_0 : i32, i32
  }
  func.func @transform_6(%arg0: i32) -> (i32, i32) {
    %c0_i32 = arith.constant 0 : i32
    %c0_i32_0 = arith.constant 0 : i32
    %c0_i32_1 = arith.constant 0 : i32
    return %c0_i32, %c0_i32_0 : i32, i32
  }
  func.func @transform_7(%arg0: i32) -> (i32, i32) {
    %c0_i32 = arith.constant 0 : i32
    %c0_i32_0 = arith.constant 0 : i32
    return %arg0, %c0_i32 : i32, i32
  }
}

</mosaic_0001>

<llo_original>
// kernel: tpu_custom_call.1
$region0: #{tpu_custom_call.1}
  #allocation0 [shape = 'u32[]', space=smem, size = 0x4, offset = 0x4, fixed_abs, tag = 'smem constant byte address 0x4 - core index']
  #allocation1 [shape = 'u32[72,128]{1,0:T(1,128)}', space=vmem, size = 0x9000, scoped, tag = 'internal scratch']
  %s0 = inlined_call_operand.vmem [shape: bf16[16,1024], index: 0, kind: input, shape index: {}]
  %s1 = inlined_call_operand.vmem [shape: bf16[16,300], index: 1, kind: input, shape index: {}]
  %s2 = inlined_call_operand.vmem [shape: bf16[1024,300], index: 2, kind: input, shape index: {}]
  %s3 = inlined_call_operand.vmem [shape: f32[1,300], index: 3, kind: input, shape index: {}]
  %s4 = inlined_call_operand.vmem [shape: bf16[300,128], index: 4, kind: input, shape index: {}]
  %s5 = inlined_call_operand.vmem [shape: bf16[300,128], index: 5, kind: input, shape index: {}]
  %s6 = inlined_call_operand.vmem [shape: f32[1,128], index: 6, kind: input, shape index: {}]
  %s7 = inlined_call_operand.hbm [shape: f32[16,128], index: 7, kind: output, shape index: {}]
  %s8 = sld [smem:[#allocation0]]
  $region38: #{tpu_custom_call.1} parent=0
    _
  %s10 = ssub.s32 1, %s8
  %s11 = scalar_select 0, %s10, %s8
  $region1: #{tpu_custom_call.1} parent=0
    #allocation2 [shape = 'u8[8192]{0}', space=vmem, size = 0x2000, scoped, tag = 'output window, operand 0, single buffered']
    #allocation3 [shape = 's32[1]{0}', space=sflag, size = 0x4, scoped, tag = 'scoped memory for tpu_custom_call.1']
    %12 = vsyncpa [#allocation3], 0
    // Predicated region
    $region2: #{tpu_custom_call.1} parent=1 // pred_check
      _
    $region3: #{tpu_custom_call.1} parent=1 // pred_check_branch
      %14 = sbr.rel (0) target = $region5
    $region4: #{tpu_custom_call.1} parent=1 // pred_region
      _
    $region5: #{tpu_custom_call.1} parent=1 // pred_fallthru
      _
    // Predicated region
    $region6: #{tpu_custom_call.1} parent=1 // pred_check
      _
    $region7: #{tpu_custom_call.1} parent=1 // pred_check_branch
      %16 = sbr.rel (0) target = $region9
    $region8: #{tpu_custom_call.1} parent=1 // pred_region
      _
    $region9: #{tpu_custom_call.1} parent=1 // pred_fallthru
      _
    // Predicated region
    $region10: #{tpu_custom_call.1} parent=1 // pred_check
      _
    $region11: #{tpu_custom_call.1} parent=1 // pred_check_branch
      %18 = sbr.rel (0) target = $region13
    $region12: #{tpu_custom_call.1} parent=1 // pred_region
      _
    $region13: #{tpu_custom_call.1} parent=1 // pred_fallthru
      _
    // Predicated region
    $region14: #{tpu_custom_call.1} parent=1 // pred_check
      _
    $region15: #{tpu_custom_call.1} parent=1 // pred_check_branch
      %20 = sbr.rel (0) target = $region17
    $region16: #{tpu_custom_call.1} parent=1 // pred_region
      _
    $region17: #{tpu_custom_call.1} parent=1 // pred_fallthru
      _
    // Predicated region
    $region18: #{tpu_custom_call.1} parent=1 // pred_check
      _
    $region19: #{tpu_custom_call.1} parent=1 // pred_check_branch
      %22 = sbr.rel (0) target = $region21
    $region20: #{tpu_custom_call.1} parent=1 // pred_region
      _
    $region21: #{tpu_custom_call.1} parent=1 // pred_fallthru
      _
    // Predicated region
    $region22: #{tpu_custom_call.1} parent=1 // pred_check
      _
    $region23: #{tpu_custom_call.1} parent=1 // pred_check_branch
      %24 = sbr.rel (0) target = $region25
    $region24: #{tpu_custom_call.1} parent=1 // pred_region
      _
    $region25: #{tpu_custom_call.1} parent=1 // pred_fallthru
      _
    // Predicated region
    $region26: #{tpu_custom_call.1} parent=1 // pred_check
      _
    $region27: #{tpu_custom_call.1} parent=1 // pred_check_branch
      %26 = sbr.rel (0) target = $region29
    $region28: #{tpu_custom_call.1} parent=1 // pred_region
      _
    $region29: #{tpu_custom_call.1} parent=1 // pred_fallthru
      _
    %v28 = vld [vmem:[%s0] sm:$0xff]
    %v29 = vld [vmem:[%s0 + $0x8] sm:$0xff]
    %v30 = vld [vmem:[%s0 + $0x10] sm:$0xff]
    %v31 = vld [vmem:[%s0 + $0x18] sm:$0xff]
    %v32 = vld [vmem:[%s0 + $0x20] sm:$0xff]
    %v33 = vld [vmem:[%s0 + $0x28] sm:$0xff]
    %v34 = vld [vmem:[%s0 + $0x30] sm:$0xff]
    %v35 = vld [vmem:[%s0 + $0x38] sm:$0xff]
    %v36 = vld [vmem:[%s2] sm:$0xff]
    %v37 = vld [vmem:[%s2 + $0x8] sm:$0xf]
    %v38 = vld [vmem:[%s2 + $0xc] sm:$0xff]
    %v39 = vld [vmem:[%s2 + $0x14] sm:$0xf]
    %v40 = vld [vmem:[%s2 + $0x18] sm:$0xff]
    %v41 = vld [vmem:[%s2 + $0x20] sm:$0xf]
    %v42 = vld [vmem:[%s2 + $0x24] sm:$0xff]
    %v43 = vld [vmem:[%s2 + $0x2c] sm:$0xf]
    %v44 = vld [vmem:[%s2 + $0x30] sm:$0xff]
    %v45 = vld [vmem:[%s2 + $0x38] sm:$0xf]
    %v46 = vld [vmem:[%s2 + $0x3c] sm:$0xff]
    %v47 = vld [vmem:[%s2 + $0x44] sm:$0xf]
    %v48 = vld [vmem:[%s2 + $0x48] sm:$0xff]
    %v49 = vld [vmem:[%s2 + $0x50] sm:$0xf]
    %v50 = vld [vmem:[%s2 + $0x54] sm:$0xff]
    %v51 = vld [vmem:[%s2 + $0x5c] sm:$0xf]
    %v52 = vld [vmem:[%s2 + $0x60] sm:$0xff]
    %v53 = vld [vmem:[%s2 + $0x68] sm:$0xf]
    %v54 = vld [vmem:[%s2 + $0x6c] sm:$0xff]
    %v55 = vld [vmem:[%s2 + $0x74] sm:$0xf]
    %v56 = vld [vmem:[%s2 + $0x78] sm:$0xff]
    %v57 = vld [vmem:[%s2 + $0x80] sm:$0xf]
    %v58 = vld [vmem:[%s2 + $0x84] sm:$0xff]
    %v59 = vld [vmem:[%s2 + $0x8c] sm:$0xf]
    %v60 = vld [vmem:[%s2 + $0x90] sm:$0xff]
    %v61 = vld [vmem:[%s2 + $0x98] sm:$0xf]
    %v62 = vld [vmem:[%s2 + $0x9c] sm:$0xff]
    %v63 = vld [vmem:[%s2 + $0xa4] sm:$0xf]
    %v64 = vld [vmem:[%s2 + $0xa8] sm:$0xff]
    %v65 = vld [vmem:[%s2 + $0xb0] sm:$0xf]
    %v66 = vld [vmem:[%s2 + $0xb4] sm:$0xff]
    %v67 = vld [vmem:[%s2 + $0xbc] sm:$0xf]
    %v68 = vld [vmem:[%s2 + $0xc0] sm:$0xff]
    %v69 = vld [vmem:[%s2 + $0xc8] sm:$0xf]
    %v70 = vld [vmem:[%s2 + $0xcc] sm:$0xff]
    %v71 = vld [vmem:[%s2 + $0xd4] sm:$0xf]
    %v72 = vld [vmem:[%s2 + $0xd8] sm:$0xff]
    %v73 = vld [vmem:[%s2 + $0xe0] sm:$0xf]
    %v74 = vld [vmem:[%s2 + $0xe4] sm:$0xff]
    %v75 = vld [vmem:[%s2 + $0xec] sm:$0xf]
    %v76 = vld [vmem:[%s2 + $0xf0] sm:$0xff]
    %v77 = vld [vmem:[%s2 + $0xf8] sm:$0xf]
    %v78 = vld [vmem:[%s2 + $0xfc] sm:$0xff]
    %v79 = vld [vmem:[%s2 + $0x104] sm:$0xf]
    %v80 = vld [vmem:[%s2 + $0x108] sm:$0xff]
    %v81 = vld [vmem:[%s2 + $0x110] sm:$0xf]
    %v82 = vld [vmem:[%s2 + $0x114] sm:$0xff]
    %v83 = vld [vmem:[%s2 + $0x11c] sm:$0xf]
    %v84 = vld [vmem:[%s2 + $0x120] sm:$0xff]
    %v85 = vld [vmem:[%s2 + $0x128] sm:$0xf]
    %v86 = vld [vmem:[%s2 + $0x12c] sm:$0xff]
    %v87 = vld [vmem:[%s2 + $0x134] sm:$0xf]
    %v88 = vld [vmem:[%s2 + $0x138] sm:$0xff]
    %v89 = vld [vmem:[%s2 + $0x140] sm:$0xf]
    %v90 = vld [vmem:[%s2 + $0x144] sm:$0xff]
    %v91 = vld [vmem:[%s2 + $0x14c] sm:$0xf]
    %v92 = vld [vmem:[%s2 + $0x150] sm:$0xff]
    %v93 = vld [vmem:[%s2 + $0x158] sm:$0xf]
    %v94 = vld [vmem:[%s2 + $0x15c] sm:$0xff]
    %v95 = vld [vmem:[%s2 + $0x164] sm:$0xf]
    %v96 = vld [vmem:[%s2 + $0x168] sm:$0xff]
    %v97 = vld [vmem:[%s2 + $0x170] sm:$0xf]
    %v98 = vld [vmem:[%s2 + $0x174] sm:$0xff]
    %v99 = vld [vmem:[%s2 + $0x17c] sm:$0xf]
    %v100 = vld [vmem:[%s2 + $0x180] sm:$0xff]
    %v101 = vld [vmem:[%s2 + $0x188] sm:$0xf]
    %v102 = vld [vmem:[%s2 + $0x18c] sm:$0xff]
    %v103 = vld [vmem:[%s2 + $0x194] sm:$0xf]
    %v104 = vld [vmem:[%s2 + $0x198] sm:$0xff]
    %v105 = vld [vmem:[%s2 + $0x1a0] sm:$0xf]
    %v106 = vld [vmem:[%s2 + $0x1a4] sm:$0xff]
    %v107 = vld [vmem:[%s2 + $0x1ac] sm:$0xf]
    %v108 = vld [vmem:[%s2 + $0x1b0] sm:$0xff]
    %v109 = vld [vmem:[%s2 + $0x1b8] sm:$0xf]
    %v110 = vld [vmem:[%s2 + $0x1bc] sm:$0xff]
    %v111 = vld [vmem:[%s2 + $0x1c4] sm:$0xf]
    %v112 = vld [vmem:[%s2 + $0x1c8] sm:$0xff]
    %v113 = vld [vmem:[%s2 + $0x1d0] sm:$0xf]
    %v114 = vld [vmem:[%s2 + $0x1d4] sm:$0xff]
    %v115 = vld [vmem:[%s2 + $0x1dc] sm:$0xf]
    %v116 = vld [vmem:[%s2 + $0x1e0] sm:$0xff]
    %v117 = vld [vmem:[%s2 + $0x1e8] sm:$0xf]
    %v118 = vld [vmem:[%s2 + $0x1ec] sm:$0xff]
    %v119 = vld [vmem:[%s2 + $0x1f4] sm:$0xf]
    %v120 = vld [vmem:[%s2 + $0x1f8] sm:$0xff]
    %v121 = vld [vmem:[%s2 + $0x200] sm:$0xf]
    %v122 = vld [vmem:[%s2 + $0x204] sm:$0xff]
    %v123 = vld [vmem:[%s2 + $0x20c] sm:$0xf]
    %v124 = vld [vmem:[%s2 + $0x210] sm:$0xff]
    %v125 = vld [vmem:[%s2 + $0x218] sm:$0xf]
    %v126 = vld [vmem:[%s2 + $0x21c] sm:$0xff]
    %v127 = vld [vmem:[%s2 + $0x224] sm:$0xf]
    %v128 = vld [vmem:[%s2 + $0x228] sm:$0xff]
    %v129 = vld [vmem:[%s2 + $0x230] sm:$0xf]
    %v130 = vld [vmem:[%s2 + $0x234] sm:$0xff]
    %v131 = vld [vmem:[%s2 + $0x23c] sm:$0xf]
    %v132 = vld [vmem:[%s2 + $0x240] sm:$0xff]
    %v133 = vld [vmem:[%s2 + $0x248] sm:$0xf]
    %v134 = vld [vmem:[%s2 + $0x24c] sm:$0xff]
    %v135 = vld [vmem:[%s2 + $0x254] sm:$0xf]
    %v136 = vld [vmem:[%s2 + $0x258] sm:$0xff]
    %v137 = vld [vmem:[%s2 + $0x260] sm:$0xf]
    %v138 = vld [vmem:[%s2 + $0x264] sm:$0xff]
    %v139 = vld [vmem:[%s2 + $0x26c] sm:$0xf]
    %v140 = vld [vmem:[%s2 + $0x270] sm:$0xff]
    %v141 = vld [vmem:[%s2 + $0x278] sm:$0xf]
    %v142 = vld [vmem:[%s2 + $0x27c] sm:$0xff]
    %v143 = vld [vmem:[%s2 + $0x284] sm:$0xf]
    %v144 = vld [vmem:[%s2 + $0x288] sm:$0xff]
    %v145 = vld [vmem:[%s2 + $0x290] sm:$0xf]
    %v146 = vld [vmem:[%s2 + $0x294] sm:$0xff]
    %v147 = vld [vmem:[%s2 + $0x29c] sm:$0xf]
    %v148 = vld [vmem:[%s2 + $0x2a0] sm:$0xff]
    %v149 = vld [vmem:[%s2 + $0x2a8] sm:$0xf]
    %v150 = vld [vmem:[%s2 + $0x2ac] sm:$0xff]
    %v151 = vld [vmem:[%s2 + $0x2b4] sm:$0xf]
    %v152 = vld [vmem:[%s2 + $0x2b8] sm:$0xff]
    %v153 = vld [vmem:[%s2 + $0x2c0] sm:$0xf]
    %v154 = vld [vmem:[%s2 + $0x2c4] sm:$0xff]
    %v155 = vld [vmem:[%s2 + $0x2cc] sm:$0xf]
    %v156 = vld [vmem:[%s2 + $0x2d0] sm:$0xff]
    %v157 = vld [vmem:[%s2 + $0x2d8] sm:$0xf]
    %v158 = vld [vmem:[%s2 + $0x2dc] sm:$0xff]
    %v159 = vld [vmem:[%s2 + $0x2e4] sm:$0xf]
    %v160 = vld [vmem:[%s2 + $0x2e8] sm:$0xff]
    %v161 = vld [vmem:[%s2 + $0x2f0] sm:$0xf]
    %v162 = vld [vmem:[%s2 + $0x2f4] sm:$0xff]
    %v163 = vld [vmem:[%s2 + $0x2fc] sm:$0xf]
    %v164 = vld [vmem:[%s2 + $0x300] sm:$0xff]
    %v165 = vld [vmem:[%s2 + $0x308] sm:$0xf]
    %v166 = vld [vmem:[%s2 + $0x30c] sm:$0xff]
    %v167 = vld [vmem:[%s2 + $0x314] sm:$0xf]
    %v168 = vld [vmem:[%s2 + $0x318] sm:$0xff]
    %v169 = vld [vmem:[%s2 + $0x320] sm:$0xf]
    %v170 = vld [vmem:[%s2 + $0x324] sm:$0xff]
    %v171 = vld [vmem:[%s2 + $0x32c] sm:$0xf]
    %v172 = vld [vmem:[%s2 + $0x330] sm:$0xff]
    %v173 = vld [vmem:[%s2 + $0x338] sm:$0xf]
    %v174 = vld [vmem:[%s2 + $0x33c] sm:$0xff]
    %v175 = vld [vmem:[%s2 + $0x344] sm:$0xf]
    %v176 = vld [vmem:[%s2 + $0x348] sm:$0xff]
    %v177 = vld [vmem:[%s2 + $0x350] sm:$0xf]
    %v178 = vld [vmem:[%s2 + $0x354] sm:$0xff]
    %v179 = vld [vmem:[%s2 + $0x35c] sm:$0xf]
    %v180 = vld [vmem:[%s2 + $0x360] sm:$0xff]
    %v181 = vld [vmem:[%s2 + $0x368] sm:$0xf]
    %v182 = vld [vmem:[%s2 + $0x36c] sm:$0xff]
    %v183 = vld [vmem:[%s2 + $0x374] sm:$0xf]
    %v184 = vld [vmem:[%s2 + $0x378] sm:$0xff]
    %v185 = vld [vmem:[%s2 + $0x380] sm:$0xf]
    %v186 = vld [vmem:[%s2 + $0x384] sm:$0xff]
    %v187 = vld [vmem:[%s2 + $0x38c] sm:$0xf]
    %v188 = vld [vmem:[%s2 + $0x390] sm:$0xff]
    %v189 = vld [vmem:[%s2 + $0x398] sm:$0xf]
    %v190 = vld [vmem:[%s2 + $0x39c] sm:$0xff]
    %v191 = vld [vmem:[%s2 + $0x3a4] sm:$0xf]
    %v192 = vld [vmem:[%s2 + $0x3a8] sm:$0xff]
    %v193 = vld [vmem:[%s2 + $0x3b0] sm:$0xf]
    %v194 = vld [vmem:[%s2 + $0x3b4] sm:$0xff]
    %v195 = vld [vmem:[%s2 + $0x3bc] sm:$0xf]
    %v196 = vld [vmem:[%s2 + $0x3c0] sm:$0xff]
    %v197 = vld [vmem:[%s2 + $0x3c8] sm:$0xf]
    %v198 = vld [vmem:[%s2 + $0x3cc] sm:$0xff]
    %v199 = vld [vmem:[%s2 + $0x3d4] sm:$0xf]
    %v200 = vld [vmem:[%s2 + $0x3d8] sm:$0xff]
    %v201 = vld [vmem:[%s2 + $0x3e0] sm:$0xf]
    %v202 = vld [vmem:[%s2 + $0x3e4] sm:$0xff]
    %v203 = vld [vmem:[%s2 + $0x3ec] sm:$0xf]
    %v204 = vld [vmem:[%s2 + $0x3f0] sm:$0xff]
    %v205 = vld [vmem:[%s2 + $0x3f8] sm:$0xf]
    %v206 = vld [vmem:[%s2 + $0x3fc] sm:$0xff]
    %v207 = vld [vmem:[%s2 + $0x404] sm:$0xf]
    %v208 = vld [vmem:[%s2 + $0x408] sm:$0xff]
    %v209 = vld [vmem:[%s2 + $0x410] sm:$0xf]
    %v210 = vld [vmem:[%s2 + $0x414] sm:$0xff]
    %v211 = vld [vmem:[%s2 + $0x41c] sm:$0xf]
    %v212 = vld [vmem:[%s2 + $0x420] sm:$0xff]
    %v213 = vld [vmem:[%s2 + $0x428] sm:$0xf]
    %v214 = vld [vmem:[%s2 + $0x42c] sm:$0xff]
    %v215 = vld [vmem:[%s2 + $0x434] sm:$0xf]
    %v216 = vld [vmem:[%s2 + $0x438] sm:$0xff]
    %v217 = vld [vmem:[%s2 + $0x440] sm:$0xf]
    %v218 = vld [vmem:[%s2 + $0x444] sm:$0xff]
    %v219 = vld [vmem:[%s2 + $0x44c] sm:$0xf]
    %v220 = vld [vmem:[%s2 + $0x450] sm:$0xff]
    %v221 = vld [vmem:[%s2 + $0x458] sm:$0xf]
    %v222 = vld [vmem:[%s2 + $0x45c] sm:$0xff]
    %v223 = vld [vmem:[%s2 + $0x464] sm:$0xf]
    %v224 = vld [vmem:[%s2 + $0x468] sm:$0xff]
    %v225 = vld [vmem:[%s2 + $0x470] sm:$0xf]
    %v226 = vld [vmem:[%s2 + $0x474] sm:$0xff]
    %v227 = vld [vmem:[%s2 + $0x47c] sm:$0xf]
    %v228 = vld [vmem:[%s2 + $0x480] sm:$0xff]
    %v229 = vld [vmem:[%s2 + $0x488] sm:$0xf]
    %v230 = vld [vmem:[%s2 + $0x48c] sm:$0xff]
    %v231 = vld [vmem:[%s2 + $0x494] sm:$0xf]
    %v232 = vld [vmem:[%s2 + $0x498] sm:$0xff]
    %v233 = vld [vmem:[%s2 + $0x4a0] sm:$0xf]
    %v234 = vld [vmem:[%s2 + $0x4a4] sm:$0xff]
    %v235 = vld [vmem:[%s2 + $0x4ac] sm:$0xf]
    %v236 = vld [vmem:[%s2 + $0x4b0] sm:$0xff]
    %v237 = vld [vmem:[%s2 + $0x4b8] sm:$0xf]
    %v238 = vld [vmem:[%s2 + $0x4bc] sm:$0xff]
    %v239 = vld [vmem:[%s2 + $0x4c4] sm:$0xf]
    %v240 = vld [vmem:[%s2 + $0x4c8] sm:$0xff]
    %v241 = vld [vmem:[%s2 + $0x4d0] sm:$0xf]
    %v242 = vld [vmem:[%s2 + $0x4d4] sm:$0xff]
    %v243 = vld [vmem:[%s2 + $0x4dc] sm:$0xf]
    %v244 = vld [vmem:[%s2 + $0x4e0] sm:$0xff]
    %v245 = vld [vmem:[%s2 + $0x4e8] sm:$0xf]
    %v246 = vld [vmem:[%s2 + $0x4ec] sm:$0xff]
    %v247 = vld [vmem:[%s2 + $0x4f4] sm:$0xf]
    %v248 = vld [vmem:[%s2 + $0x4f8] sm:$0xff]
    %v249 = vld [vmem:[%s2 + $0x500] sm:$0xf]
    %v250 = vld [vmem:[%s2 + $0x504] sm:$0xff]
    %v251 = vld [vmem:[%s2 + $0x50c] sm:$0xf]
    %v252 = vld [vmem:[%s2 + $0x510] sm:$0xff]
    %v253 = vld [vmem:[%s2 + $0x518] sm:$0xf]
    %v254 = vld [vmem:[%s2 + $0x51c] sm:$0xff]
    %v255 = vld [vmem:[%s2 + $0x524] sm:$0xf]
    %v256 = vld [vmem:[%s2 + $0x528] sm:$0xff]
    %v257 = vld [vmem:[%s2 + $0x530] sm:$0xf]
    %v258 = vld [vmem:[%s2 + $0x534] sm:$0xff]
    %v259 = vld [vmem:[%s2 + $0x53c] sm:$0xf]
    %v260 = vld [vmem:[%s2 + $0x540] sm:$0xff]
    %v261 = vld [vmem:[%s2 + $0x548] sm:$0xf]
    %v262 = vld [vmem:[%s2 + $0x54c] sm:$0xff]
    %v263 = vld [vmem:[%s2 + $0x554] sm:$0xf]
    %v264 = vld [vmem:[%s2 + $0x558] sm:$0xff]
    %v265 = vld [vmem:[%s2 + $0x560] sm:$0xf]
    %v266 = vld [vmem:[%s2 + $0x564] sm:$0xff]
    %v267 = vld [vmem:[%s2 + $0x56c] sm:$0xf]
    %v268 = vld [vmem:[%s2 + $0x570] sm:$0xff]
    %v269 = vld [vmem:[%s2 + $0x578] sm:$0xf]
    %v270 = vld [vmem:[%s2 + $0x57c] sm:$0xff]
    %v271 = vld [vmem:[%s2 + $0x584] sm:$0xf]
    %v272 = vld [vmem:[%s2 + $0x588] sm:$0xff]
    %v273 = vld [vmem:[%s2 + $0x590] sm:$0xf]
    %v274 = vld [vmem:[%s2 + $0x594] sm:$0xff]
    %v275 = vld [vmem:[%s2 + $0x59c] sm:$0xf]
    %v276 = vld [vmem:[%s2 + $0x5a0] sm:$0xff]
    %v277 = vld [vmem:[%s2 + $0x5a8] sm:$0xf]
    %v278 = vld [vmem:[%s2 + $0x5ac] sm:$0xff]
    %v279 = vld [vmem:[%s2 + $0x5b4] sm:$0xf]
    %v280 = vld [vmem:[%s2 + $0x5b8] sm:$0xff]
    %v281 = vld [vmem:[%s2 + $0x5c0] sm:$0xf]
    %v282 = vld [vmem:[%s2 + $0x5c4] sm:$0xff]
    %v283 = vld [vmem:[%s2 + $0x5cc] sm:$0xf]
    %v284 = vld [vmem:[%s2 + $0x5d0] sm:$0xff]
    %v285 = vld [vmem:[%s2 + $0x5d8] sm:$0xf]
    %v286 = vld [vmem:[%s2 + $0x5dc] sm:$0xff]
    %v287 = vld [vmem:[%s2 + $0x5e4] sm:$0xf]
    %v288 = vld [vmem:[%s2 + $0x5e8] sm:$0xff]
    %v289 = vld [vmem:[%s2 + $0x5f0] sm:$0xf]
    %v290 = vld [vmem:[%s2 + $0x5f4] sm:$0xff]
    %v291 = vld [vmem:[%s2 + $0x5fc] sm:$0xf]
    %v292 = vld [vmem:[%s3] sm:$0x7]
    %v294 = vperm.slane %v292, 0
    %v295 = vperm.slane %v292, 1
    %v296 = vperm.slane %v292, 2
    %v308 = vunpack.c.l.b16 %v28
    %v309 = vunpack.c.h.b16 %v28
    %v310 = vunpack.c.l.b16 %v29
    %v311 = vunpack.c.h.b16 %v29
    %v312 = vunpack.c.l.b16 %v30
    %v313 = vunpack.c.h.b16 %v30
    %v314 = vunpack.c.l.b16 %v31
    %v315 = vunpack.c.h.b16 %v31
    %v316 = vunpack.c.l.b16 %v32
    %v317 = vunpack.c.h.b16 %v32
    %v318 = vunpack.c.l.b16 %v33
    %v319 = vunpack.c.h.b16 %v33
    %v320 = vunpack.c.l.b16 %v34
    %v321 = vunpack.c.h.b16 %v34
    %v322 = vunpack.c.l.b16 %v35
    %v323 = vunpack.c.h.b16 %v35
    %v324 = vpack.c.b16 %v316, %v308
    %v325 = vpack.c.b16 %v317, %v309
    %v326 = vpack.c.b16 %v318, %v310
    %v327 = vpack.c.b16 %v319, %v311
    %v328 = vpack.c.b16 %v320, %v312
    %v329 = vpack.c.b16 %v321, %v313
    %v330 = vpack.c.b16 %v322, %v314
    %v331 = vpack.c.b16 %v323, %v315
    %v596 = vunpack.c.l.b16 %v36
    %v597 = vunpack.c.h.b16 %v36
    %v598 = vunpack.c.l.b16 %v37
    %v599 = vunpack.c.l.b16 %v38
    %v600 = vunpack.c.h.b16 %v38
    %v601 = vunpack.c.l.b16 %v39
    %v602 = vunpack.c.l.b16 %v40
    %v603 = vunpack.c.h.b16 %v40
    %v604 = vunpack.c.l.b16 %v41
    %v605 = vunpack.c.l.b16 %v42
    %v606 = vunpack.c.h.b16 %v42
    %v607 = vunpack.c.l.b16 %v43
    %v608 = vunpack.c.l.b16 %v44
    %v609 = vunpack.c.h.b16 %v44
    %v610 = vunpack.c.l.b16 %v45
    %v611 = vunpack.c.l.b16 %v46
    %v612 = vunpack.c.h.b16 %v46
    %v613 = vunpack.c.l.b16 %v47
    %v614 = vunpack.c.l.b16 %v48
    %v615 = vunpack.c.h.b16 %v48
    %v616 = vunpack.c.l.b16 %v49
    %v617 = vunpack.c.l.b16 %v50
    %v618 = vunpack.c.h.b16 %v50
    %v619 = vunpack.c.l.b16 %v51
    %v620 = vunpack.c.l.b16 %v52
    %v621 = vunpack.c.h.b16 %v52
    %v622 = vunpack.c.l.b16 %v53
    %v623 = vunpack.c.l.b16 %v54
    %v624 = vunpack.c.h.b16 %v54
    %v625 = vunpack.c.l.b16 %v55
    %v626 = vunpack.c.l.b16 %v56
    %v627 = vunpack.c.h.b16 %v56
    %v628 = vunpack.c.l.b16 %v57
    %v629 = vunpack.c.l.b16 %v58
    %v630 = vunpack.c.h.b16 %v58
    %v631 = vunpack.c.l.b16 %v59
    %v632 = vunpack.c.l.b16 %v60
    %v633 = vunpack.c.h.b16 %v60
    %v634 = vunpack.c.l.b16 %v61
    %v635 = vunpack.c.l.b16 %v62
    %v636 = vunpack.c.h.b16 %v62
    %v637 = vunpack.c.l.b16 %v63
    %v638 = vunpack.c.l.b16 %v64
    %v639 = vunpack.c.h.b16 %v64
    %v640 = vunpack.c.l.b16 %v65
    %v641 = vunpack.c.l.b16 %v66
    %v642 = vunpack.c.h.b16 %v66
    %v643 = vunpack.c.l.b16 %v67
    %v644 = vunpack.c.l.b16 %v68
    %v645 = vunpack.c.h.b16 %v68
    %v646 = vunpack.c.l.b16 %v69
    %v647 = vunpack.c.l.b16 %v70
    %v648 = vunpack.c.h.b16 %v70
    %v649 = vunpack.c.l.b16 %v71
    %v650 = vunpack.c.l.b16 %v72
    %v651 = vunpack.c.h.b16 %v72
    %v652 = vunpack.c.l.b16 %v73
    %v653 = vunpack.c.l.b16 %v74
    %v654 = vunpack.c.h.b16 %v74
    %v655 = vunpack.c.l.b16 %v75
    %v656 = vunpack.c.l.b16 %v76
    %v657 = vunpack.c.h.b16 %v76
    %v658 = vunpack.c.l.b16 %v77
    %v659 = vunpack.c.l.b16 %v78
    %v660 = vunpack.c.h.b16 %v78
    %v661 = vunpack.c.l.b16 %v79
    %v662 = vunpack.c.l.b16 %v80
    %v663 = vunpack.c.h.b16 %v80
    %v664 = vunpack.c.l.b16 %v81
    %v665 = vunpack.c.l.b16 %v82
    %v666 = vunpack.c.h.b16 %v82
    %v667 = vunpack.c.l.b16 %v83
    %v668 = vunpack.c.l.b16 %v84
    %v669 = vunpack.c.h.b16 %v84
    %v670 = vunpack.c.l.b16 %v85
    %v671 = vunpack.c.l.b16 %v86
    %v672 = vunpack.c.h.b16 %v86
    %v673 = vunpack.c.l.b16 %v87
    %v674 = vunpack.c.l.b16 %v88
    %v675 = vunpack.c.h.b16 %v88
    %v676 = vunpack.c.l.b16 %v89
    %v677 = vunpack.c.l.b16 %v90
    %v678 = vunpack.c.h.b16 %v90
    %v679 = vunpack.c.l.b16 %v91
    %v680 = vunpack.c.l.b16 %v92
    %v681 = vunpack.c.h.b16 %v92
    %v682 = vunpack.c.l.b16 %v93
    %v683 = vunpack.c.l.b16 %v94
    %v684 = vunpack.c.h.b16 %v94
    %v685 = vunpack.c.l.b16 %v95
    %v686 = vunpack.c.l.b16 %v96
    %v687 = vunpack.c.h.b16 %v96
    %v688 = vunpack.c.l.b16 %v97
    %v689 = vunpack.c.l.b16 %v98
    %v690 = vunpack.c.h.b16 %v98
    %v691 = vunpack.c.l.b16 %v99
    %v692 = vunpack.c.l.b16 %v100
    %v693 = vunpack.c.h.b16 %v100
    %v694 = vunpack.c.l.b16 %v101
    %v695 = vunpack.c.l.b16 %v102
    %v696 = vunpack.c.h.b16 %v102
    %v697 = vunpack.c.l.b16 %v103
    %v698 = vunpack.c.l.b16 %v104
    %v699 = vunpack.c.h.b16 %v104
    %v700 = vunpack.c.l.b16 %v105
    %v701 = vunpack.c.l.b16 %v106
    %v702 = vunpack.c.h.b16 %v106
    %v703 = vunpack.c.l.b16 %v107
    %v704 = vunpack.c.l.b16 %v108
    %v705 = vunpack.c.h.b16 %v108
    %v706 = vunpack.c.l.b16 %v109
    %v707 = vunpack.c.l.b16 %v110
    %v708 = vunpack.c.h.b16 %v110
    %v709 = vunpack.c.l.b16 %v111
    %v710 = vunpack.c.l.b16 %v112
    %v711 = vunpack.c.h.b16 %v112
    %v712 = vunpack.c.l.b16 %v113
    %v713 = vunpack.c.l.b16 %v114
    %v714 = vunpack.c.h.b16 %v114
    %v715 = vunpack.c.l.b16 %v115
    %v716 = vunpack.c.l.b16 %v116
    %v717 = vunpack.c.h.b16 %v116
    %v718 = vunpack.c.l.b16 %v117
    %v719 = vunpack.c.l.b16 %v118
    %v720 = vunpack.c.h.b16 %v118
    %v721 = vunpack.c.l.b16 %v119
    %v722 = vunpack.c.l.b16 %v120
    %v723 = vunpack.c.h.b16 %v120
    %v724 = vunpack.c.l.b16 %v121
    %v725 = vunpack.c.l.b16 %v122
    %v726 = vunpack.c.h.b16 %v122
    %v727 = vunpack.c.l.b16 %v123
    %v728 = vunpack.c.l.b16 %v124
    %v729 = vunpack.c.h.b16 %v124
    %v730 = vunpack.c.l.b16 %v125
    %v731 = vunpack.c.l.b16 %v126
    %v732 = vunpack.c.h.b16 %v126
    %v733 = vunpack.c.l.b16 %v127
    %v734 = vunpack.c.l.b16 %v128
    %v735 = vunpack.c.h.b16 %v128
    %v736 = vunpack.c.l.b16 %v129
    %v737 = vunpack.c.l.b16 %v130
    %v738 = vunpack.c.h.b16 %v130
    %v739 = vunpack.c.l.b16 %v131
    %v740 = vunpack.c.l.b16 %v132
    %v741 = vunpack.c.h.b16 %v132
    %v742 = vunpack.c.l.b16 %v133
    %v743 = vunpack.c.l.b16 %v134
    %v744 = vunpack.c.h.b16 %v134
    %v745 = vunpack.c.l.b16 %v135
    %v746 = vunpack.c.l.b16 %v136
    %v747 = vunpack.c.h.b16 %v136
    %v748 = vunpack.c.l.b16 %v137
    %v749 = vunpack.c.l.b16 %v138
    %v750 = vunpack.c.h.b16 %v138
    %v751 = vunpack.c.l.b16 %v139
    %v752 = vunpack.c.l.b16 %v140
    %v753 = vunpack.c.h.b16 %v140
    %v754 = vunpack.c.l.b16 %v141
    %v755 = vunpack.c.l.b16 %v142
    %v756 = vunpack.c.h.b16 %v142
    %v757 = vunpack.c.l.b16 %v143
    %v758 = vunpack.c.l.b16 %v144
    %v759 = vunpack.c.h.b16 %v144
    %v760 = vunpack.c.l.b16 %v145
    %v761 = vunpack.c.l.b16 %v146
    %v762 = vunpack.c.h.b16 %v146
    %v763 = vunpack.c.l.b16 %v147
    %v764 = vunpack.c.l.b16 %v148
    %v765 = vunpack.c.h.b16 %v148
    %v766 = vunpack.c.l.b16 %v149
    %v767 = vunpack.c.l.b16 %v150
    %v768 = vunpack.c.h.b16 %v150
    %v769 = vunpack.c.l.b16 %v151
    %v770 = vunpack.c.l.b16 %v152
    %v771 = vunpack.c.h.b16 %v152
    %v772 = vunpack.c.l.b16 %v153
    %v773 = vunpack.c.l.b16 %v154
    %v774 = vunpack.c.h.b16 %v154
    %v775 = vunpack.c.l.b16 %v155
    %v776 = vunpack.c.l.b16 %v156
    %v777 = vunpack.c.h.b16 %v156
    %v778 = vunpack.c.l.b16 %v157
    %v779 = vunpack.c.l.b16 %v158
    %v780 = vunpack.c.h.b16 %v158
    %v781 = vunpack.c.l.b16 %v159
    %v782 = vunpack.c.l.b16 %v160
    %v783 = vunpack.c.h.b16 %v160
    %v784 = vunpack.c.l.b16 %v161
    %v785 = vunpack.c.l.b16 %v162
    %v786 = vunpack.c.h.b16 %v162
    %v787 = vunpack.c.l.b16 %v163
    %v788 = vunpack.c.l.b16 %v164
    %v789 = vunpack.c.h.b16 %v164
    %v790 = vunpack.c.l.b16 %v165
    %v791 = vunpack.c.l.b16 %v166
    %v792 = vunpack.c.h.b16 %v166
    %v793 = vunpack.c.l.b16 %v167
    %v794 = vunpack.c.l.b16 %v168
    %v795 = vunpack.c.h.b16 %v168
    %v796 = vunpack.c.l.b16 %v169
    %v797 = vunpack.c.l.b16 %v170
    %v798 = vunpack.c.h.b16 %v170
    %v799 = vunpack.c.l.b16 %v171
    %v800 = vunpack.c.l.b16 %v172
    %v801 = vunpack.c.h.b16 %v172
    %v802 = vunpack.c.l.b16 %v173
    %v803 = vunpack.c.l.b16 %v174
    %v804 = vunpack.c.h.b16 %v174
    %v805 = vunpack.c.l.b16 %v175
    %v806 = vunpack.c.l.b16 %v176
    %v807 = vunpack.c.h.b16 %v176
    %v808 = vunpack.c.l.b16 %v177
    %v809 = vunpack.c.l.b16 %v178
    %v810 = vunpack.c.h.b16 %v178
    %v811 = vunpack.c.l.b16 %v179
    %v812 = vunpack.c.l.b16 %v180
    %v813 = vunpack.c.h.b16 %v180
    %v814 = vunpack.c.l.b16 %v181
    %v815 = vunpack.c.l.b16 %v182
    %v816 = vunpack.c.h.b16 %v182
    %v817 = vunpack.c.l.b16 %v183
    %v818 = vunpack.c.l.b16 %v184
    %v819 = vunpack.c.h.b16 %v184
    %v820 = vunpack.c.l.b16 %v185
    %v821 = vunpack.c.l.b16 %v186
    %v822 = vunpack.c.h.b16 %v186
    %v823 = vunpack.c.l.b16 %v187
    %v824 = vunpack.c.l.b16 %v188
    %v825 = vunpack.c.h.b16 %v188
    %v826 = vunpack.c.l.b16 %v189
    %v827 = vunpack.c.l.b16 %v190
    %v828 = vunpack.c.h.b16 %v190
    %v829 = vunpack.c.l.b16 %v191
    %v830 = vunpack.c.l.b16 %v192
    %v831 = vunpack.c.h.b16 %v192
    %v832 = vunpack.c.l.b16 %v193
    %v833 = vunpack.c.l.b16 %v194
    %v834 = vunpack.c.h.b16 %v194
    %v835 = vunpack.c.l.b16 %v195
    %v836 = vunpack.c.l.b16 %v196
    %v837 = vunpack.c.h.b16 %v196
    %v838 = vunpack.c.l.b16 %v197
    %v839 = vunpack.c.l.b16 %v198
    %v840 = vunpack.c.h.b16 %v198
    %v841 = vunpack.c.l.b16 %v199
    %v842 = vunpack.c.l.b16 %v200
    %v843 = vunpack.c.h.b16 %v200
    %v844 = vunpack.c.l.b16 %v201
    %v845 = vunpack.c.l.b16 %v202
    %v846 = vunpack.c.h.b16 %v202
    %v847 = vunpack.c.l.b16 %v203
    %v848 = vunpack.c.l.b16 %v204
    %v849 = vunpack.c.h.b16 %v204
    %v850 = vunpack.c.l.b16 %v205
    %v851 = vunpack.c.l.b16 %v206
    %v852 = vunpack.c.h.b16 %v206
    %v853 = vunpack.c.l.b16 %v207
    %v854 = vunpack.c.l.b16 %v208
    %v855 = vunpack.c.h.b16 %v208
    %v856 = vunpack.c.l.b16 %v209
    %v857 = vunpack.c.l.b16 %v210
    %v858 = vunpack.c.h.b16 %v210
    %v859 = vunpack.c.l.b16 %v211
    %v860 = vunpack.c.l.b16 %v212
    %v861 = vunpack.c.h.b16 %v212
    %v862 = vunpack.c.l.b16 %v213
    %v863 = vunpack.c.l.b16 %v214
    %v864 = vunpack.c.h.b16 %v214
    %v865 = vunpack.c.l.b16 %v215
    %v866 = vunpack.c.l.b16 %v216
    %v867 = vunpack.c.h.b16 %v216
    %v868 = vunpack.c.l.b16 %v217
    %v869 = vunpack.c.l.b16 %v218
    %v870 = vunpack.c.h.b16 %v218
    %v871 = vunpack.c.l.b16 %v219
    %v872 = vunpack.c.l.b16 %v220
    %v873 = vunpack.c.h.b16 %v220
    %v874 = vunpack.c.l.b16 %v221
    %v875 = vunpack.c.l.b16 %v222
    %v876 = vunpack.c.h.b16 %v222
    %v877 = vunpack.c.l.b16 %v223
    %v878 = vunpack.c.l.b16 %v224
    %v879 = vunpack.c.h.b16 %v224
    %v880 = vunpack.c.l.b16 %v225
    %v881 = vunpack.c.l.b16 %v226
    %v882 = vunpack.c.h.b16 %v226
    %v883 = vunpack.c.l.b16 %v227
    %v884 = vunpack.c.l.b16 %v228
    %v885 = vunpack.c.h.b16 %v228
    %v886 = vunpack.c.l.b16 %v229
    %v887 = vunpack.c.l.b16 %v230
    %v888 = vunpack.c.h.b16 %v230
    %v889 = vunpack.c.l.b16 %v231
    %v890 = vunpack.c.l.b16 %v232
    %v891 = vunpack.c.h.b16 %v232
    %v892 = vunpack.c.l.b16 %v233
    %v893 = vunpack.c.l.b16 %v234
    %v894 = vunpack.c.h.b16 %v234
    %v895 = vunpack.c.l.b16 %v235
    %v896 = vunpack.c.l.b16 %v236
    %v897 = vunpack.c.h.b16 %v236
    %v898 = vunpack.c.l.b16 %v237
    %v899 = vunpack.c.l.b16 %v238
    %v900 = vunpack.c.h.b16 %v238
    %v901 = vunpack.c.l.b16 %v239
    %v902 = vunpack.c.l.b16 %v240
    %v903 = vunpack.c.h.b16 %v240
    %v904 = vunpack.c.l.b16 %v241
    %v905 = vunpack.c.l.b16 %v242
    %v906 = vunpack.c.h.b16 %v242
    %v907 = vunpack.c.l.b16 %v243
    %v908 = vunpack.c.l.b16 %v244
    %v909 = vunpack.c.h.b16 %v244
    %v910 = vunpack.c.l.b16 %v245
    %v911 = vunpack.c.l.b16 %v246
    %v912 = vunpack.c.h.b16 %v246
    %v913 = vunpack.c.l.b16 %v247
    %v914 = vunpack.c.l.b16 %v248
    %v915 = vunpack.c.h.b16 %v248
    %v916 = vunpack.c.l.b16 %v249
    %v917 = vunpack.c.l.b16 %v250
    %v918 = vunpack.c.h.b16 %v250
    %v919 = vunpack.c.l.b16 %v251
    %v920 = vunpack.c.l.b16 %v252
    %v921 = vunpack.c.h.b16 %v252
    %v922 = vunpack.c.l.b16 %v253
    %v923 = vunpack.c.l.b16 %v254
    %v924 = vunpack.c.h.b16 %v254
    %v925 = vunpack.c.l.b16 %v255
    %v926 = vunpack.c.l.b16 %v256
    %v927 = vunpack.c.h.b16 %v256
    %v928 = vunpack.c.l.b16 %v257
    %v929 = vunpack.c.l.b16 %v258
    %v930 = vunpack.c.h.b16 %v258
    %v931 = vunpack.c.l.b16 %v259
    %v932 = vunpack.c.l.b16 %v260
    %v933 = vunpack.c.h.b16 %v260
    %v934 = vunpack.c.l.b16 %v261
    %v935 = vunpack.c.l.b16 %v262
    %v936 = vunpack.c.h.b16 %v262
    %v937 = vunpack.c.l.b16 %v263
    %v938 = vunpack.c.l.b16 %v264
    %v939 = vunpack.c.h.b16 %v264
    %v940 = vunpack.c.l.b16 %v265
    %v941 = vunpack.c.l.b16 %v266
    %v942 = vunpack.c.h.b16 %v266
    %v943 = vunpack.c.l.b16 %v267
    %v944 = vunpack.c.l.b16 %v268
    %v945 = vunpack.c.h.b16 %v268
    %v946 = vunpack.c.l.b16 %v269
    %v947 = vunpack.c.l.b16 %v270
    %v948 = vunpack.c.h.b16 %v270
    %v949 = vunpack.c.l.b16 %v271
    %v950 = vunpack.c.l.b16 %v272
    %v951 = vunpack.c.h.b16 %v272
    %v952 = vunpack.c.l.b16 %v273
    %v953 = vunpack.c.l.b16 %v274
    %v954 = vunpack.c.h.b16 %v274
    %v955 = vunpack.c.l.b16 %v275
    %v956 = vunpack.c.l.b16 %v276
    %v957 = vunpack.c.h.b16 %v276
    %v958 = vunpack.c.l.b16 %v277
    %v959 = vunpack.c.l.b16 %v278
    %v960 = vunpack.c.h.b16 %v278
    %v961 = vunpack.c.l.b16 %v279
    %v962 = vunpack.c.l.b16 %v280
    %v963 = vunpack.c.h.b16 %v280
    %v964 = vunpack.c.l.b16 %v281
    %v965 = vunpack.c.l.b16 %v282
    %v966 = vunpack.c.h.b16 %v282
    %v967 = vunpack.c.l.b16 %v283
    %v968 = vunpack.c.l.b16 %v284
    %v969 = vunpack.c.h.b16 %v284
    %v970 = vunpack.c.l.b16 %v285
    %v971 = vunpack.c.l.b16 %v286
    %v972 = vunpack.c.h.b16 %v286
    %v973 = vunpack.c.l.b16 %v287
    %v974 = vunpack.c.l.b16 %v288
    %v975 = vunpack.c.h.b16 %v288
    %v976 = vunpack.c.l.b16 %v289
    %v977 = vunpack.c.l.b16 %v290
    %v978 = vunpack.c.h.b16 %v290
    %v979 = vunpack.c.l.b16 %v291
    %v980 = vpack.c.b16 %v599, %v596
    %v981 = vpack.c.b16 %v600, %v597
    %v982 = vpack.c.b16 %v601, %v598
    %v983 = vpack.c.b16 %v605, %v602
    %v984 = vpack.c.b16 %v606, %v603
    %v985 = vpack.c.b16 %v607, %v604
    %v986 = vpack.c.b16 %v611, %v608
    %v987 = vpack.c.b16 %v612, %v609
    %v988 = vpack.c.b16 %v613, %v610
    %v989 = vpack.c.b16 %v617, %v614
    %v990 = vpack.c.b16 %v618, %v615
    %v991 = vpack.c.b16 %v619, %v616
    %v992 = vpack.c.b16 %v623, %v620
    %v993 = vpack.c.b16 %v624, %v621
    %v994 = vpack.c.b16 %v625, %v622
    %v995 = vpack.c.b16 %v629, %v626
    %v996 = vpack.c.b16 %v630, %v627
    %v997 = vpack.c.b16 %v631, %v628
    %v998 = vpack.c.b16 %v635, %v632
    %v999 = vpack.c.b16 %v636, %v633
    %v1000 = vpack.c.b16 %v637, %v634
    %v1001 = vpack.c.b16 %v641, %v638
    %v1002 = vpack.c.b16 %v642, %v639
    %v1003 = vpack.c.b16 %v643, %v640
    %v1004 = vpack.c.b16 %v647, %v644
    %v1005 = vpack.c.b16 %v648, %v645
    %v1006 = vpack.c.b16 %v649, %v646
    %v1007 = vpack.c.b16 %v653, %v650
    %v1008 = vpack.c.b16 %v654, %v651
    %v1009 = vpack.c.b16 %v655, %v652
    %v1010 = vpack.c.b16 %v659, %v656
    %v1011 = vpack.c.b16 %v660, %v657
    %v1012 = vpack.c.b16 %v661, %v658
    %v1013 = vpack.c.b16 %v665, %v662
    %v1014 = vpack.c.b16 %v666, %v663
    %v1015 = vpack.c.b16 %v667, %v664
    %v1016 = vpack.c.b16 %v671, %v668
    %v1017 = vpack.c.b16 %v672, %v669
    %v1018 = vpack.c.b16 %v673, %v670
    %v1019 = vpack.c.b16 %v677, %v674
    %v1020 = vpack.c.b16 %v678, %v675
    %v1021 = vpack.c.b16 %v679, %v676
    %v1022 = vpack.c.b16 %v683, %v680
    %v1023 = vpack.c.b16 %v684, %v681
    %v1024 = vpack.c.b16 %v685, %v682
    %v1025 = vpack.c.b16 %v689, %v686
    %v1026 = vpack.c.b16 %v690, %v687
    %v1027 = vpack.c.b16 %v691, %v688
    %v1028 = vpack.c.b16 %v695, %v692
    %v1029 = vpack.c.b16 %v696, %v693
    %v1030 = vpack.c.b16 %v697, %v694
    %v1031 = vpack.c.b16 %v701, %v698
    %v1032 = vpack.c.b16 %v702, %v699
    %v1033 = vpack.c.b16 %v703, %v700
    %v1034 = vpack.c.b16 %v707, %v704
    %v1035 = vpack.c.b16 %v708, %v705
    %v1036 = vpack.c.b16 %v709, %v706
    %v1037 = vpack.c.b16 %v713, %v710
    %v1038 = vpack.c.b16 %v714, %v711
    %v1039 = vpack.c.b16 %v715, %v712
    %v1040 = vpack.c.b16 %v719, %v716
    %v1041 = vpack.c.b16 %v720, %v717
    %v1042 = vpack.c.b16 %v721, %v718
    %v1043 = vpack.c.b16 %v725, %v722
    %v1044 = vpack.c.b16 %v726, %v723
    %v1045 = vpack.c.b16 %v727, %v724
    %v1046 = vpack.c.b16 %v731, %v728
    %v1047 = vpack.c.b16 %v732, %v729
    %v1048 = vpack.c.b16 %v733, %v730
    %v1049 = vpack.c.b16 %v737, %v734
    %v1050 = vpack.c.b16 %v738, %v735
    %v1051 = vpack.c.b16 %v739, %v736
    %v1052 = vpack.c.b16 %v743, %v740
    %v1053 = vpack.c.b16 %v744, %v741
    %v1054 = vpack.c.b16 %v745, %v742
    %v1055 = vpack.c.b16 %v749, %v746
    %v1056 = vpack.c.b16 %v750, %v747
    %v1057 = vpack.c.b16 %v751, %v748
    %v1058 = vpack.c.b16 %v755, %v752
    %v1059 = vpack.c.b16 %v756, %v753
    %v1060 = vpack.c.b16 %v757, %v754
    %v1061 = vpack.c.b16 %v761, %v758
    %v1062 = vpack.c.b16 %v762, %v759
    %v1063 = vpack.c.b16 %v763, %v760
    %v1064 = vpack.c.b16 %v767, %v764
    %v1065 = vpack.c.b16 %v768, %v765
    %v1066 = vpack.c.b16 %v769, %v766
    %v1067 = vpack.c.b16 %v773, %v770
    %v1068 = vpack.c.b16 %v774, %v771
    %v1069 = vpack.c.b16 %v775, %v772
    %v1070 = vpack.c.b16 %v779, %v776
    %v1071 = vpack.c.b16 %v780, %v777
    %v1072 = vpack.c.b16 %v781, %v778
    %v1073 = vpack.c.b16 %v785, %v782
    %v1074 = vpack.c.b16 %v786, %v783
    %v1075 = vpack.c.b16 %v787, %v784
    %v1076 = vpack.c.b16 %v791, %v788
    %v1077 = vpack.c.b16 %v792, %v789
    %v1078 = vpack.c.b16 %v793, %v790
    %v1079 = vpack.c.b16 %v797, %v794
    %v1080 = vpack.c.b16 %v798, %v795
    %v1081 = vpack.c.b16 %v799, %v796
    %v1082 = vpack.c.b16 %v803, %v800
    %v1083 = vpack.c.b16 %v804, %v801
    %v1084 = vpack.c.b16 %v805, %v802
    %v1085 = vpack.c.b16 %v809, %v806
    %v1086 = vpack.c.b16 %v810, %v807
    %v1087 = vpack.c.b16 %v811, %v808
    %v1088 = vpack.c.b16 %v815, %v812
    %v1089 = vpack.c.b16 %v816, %v813
    %v1090 = vpack.c.b16 %v817, %v814
    %v1091 = vpack.c.b16 %v821, %v818
    %v1092 = vpack.c.b16 %v822, %v819
    %v1093 = vpack.c.b16 %v823, %v820
    %v1094 = vpack.c.b16 %v827, %v824
    %v1095 = vpack.c.b16 %v828, %v825
    %v1096 = vpack.c.b16 %v829, %v826
    %v1097 = vpack.c.b16 %v833, %v830
    %v1098 = vpack.c.b16 %v834, %v831
    %v1099 = vpack.c.b16 %v835, %v832
    %v1100 = vpack.c.b16 %v839, %v836
    %v1101 = vpack.c.b16 %v840, %v837
    %v1102 = vpack.c.b16 %v841, %v838
    %v1103 = vpack.c.b16 %v845, %v842
    %v1104 = vpack.c.b16 %v846, %v843
    %v1105 = vpack.c.b16 %v847, %v844
    %v1106 = vpack.c.b16 %v851, %v848
    %v1107 = vpack.c.b16 %v852, %v849
    %v1108 = vpack.c.b16 %v853, %v850
    %v1109 = vpack.c.b16 %v857, %v854
    %v1110 = vpack.c.b16 %v858, %v855
    %v1111 = vpack.c.b16 %v859, %v856
    %v1112 = vpack.c.b16 %v863, %v860
    %v1113 = vpack.c.b16 %v864, %v861
    %v1114 = vpack.c.b16 %v865, %v862
    %v1115 = vpack.c.b16 %v869, %v866
    %v1116 = vpack.c.b16 %v870, %v867
    %v1117 = vpack.c.b16 %v871, %v868
    %v1118 = vpack.c.b16 %v875, %v872
    %v1119 = vpack.c.b16 %v876, %v873
    %v1120 = vpack.c.b16 %v877, %v874
    %v1121 = vpack.c.b16 %v881, %v878
    %v1122 = vpack.c.b16 %v882, %v879
    %v1123 = vpack.c.b16 %v883, %v880
    %v1124 = vpack.c.b16 %v887, %v884
    %v1125 = vpack.c.b16 %v888, %v885
    %v1126 = vpack.c.b16 %v889, %v886
    %v1127 = vpack.c.b16 %v893, %v890
    %v1128 = vpack.c.b16 %v894, %v891
    %v1129 = vpack.c.b16 %v895, %v892
    %v1130 = vpack.c.b16 %v899, %v896
    %v1131 = vpack.c.b16 %v900, %v897
    %v1132 = vpack.c.b16 %v901, %v898
    %v1133 = vpack.c.b16 %v905, %v902
    %v1134 = vpack.c.b16 %v906, %v903
    %v1135 = vpack.c.b16 %v907, %v904
    %v1136 = vpack.c.b16 %v911, %v908
    %v1137 = vpack.c.b16 %v912, %v909
    %v1138 = vpack.c.b16 %v913, %v910
    %v1139 = vpack.c.b16 %v917, %v914
    %v1140 = vpack.c.b16 %v918, %v915
    %v1141 = vpack.c.b16 %v919, %v916
    %v1142 = vpack.c.b16 %v923, %v920
    %v1143 = vpack.c.b16 %v924, %v921
    %v1144 = vpack.c.b16 %v925, %v922
    %v1145 = vpack.c.b16 %v929, %v926
    %v1146 = vpack.c.b16 %v930, %v927
    %v1147 = vpack.c.b16 %v931, %v928
    %v1148 = vpack.c.b16 %v935, %v932
    %v1149 = vpack.c.b16 %v936, %v933
    %v1150 = vpack.c.b16 %v937, %v934
    %v1151 = vpack.c.b16 %v941, %v938
    %v1152 = vpack.c.b16 %v942, %v939
    %v1153 = vpack.c.b16 %v943, %v940
    %v1154 = vpack.c.b16 %v947, %v944
    %v1155 = vpack.c.b16 %v948, %v945
    %v1156 = vpack.c.b16 %v949, %v946
    %v1157 = vpack.c.b16 %v953, %v950
    %v1158 = vpack.c.b16 %v954, %v951
    %v1159 = vpack.c.b16 %v955, %v952
    %v1160 = vpack.c.b16 %v959, %v956
    %v1161 = vpack.c.b16 %v960, %v957
    %v1162 = vpack.c.b16 %v961, %v958
    %v1163 = vpack.c.b16 %v965, %v962
    %v1164 = vpack.c.b16 %v966, %v963
    %v1165 = vpack.c.b16 %v967, %v964
    %v1166 = vpack.c.b16 %v971, %v968
    %v1167 = vpack.c.b16 %v972, %v969
    %v1168 = vpack.c.b16 %v973, %v970
    %v1169 = vpack.c.b16 %v977, %v974
    %v1170 = vpack.c.b16 %v978, %v975
    %v1171 = vpack.c.b16 %v979, %v976
    %1364 = vmatpush.bf16.msra.mxu0 %v1001
    %1365 = vmatpush.bf16.msra.mxu0 %v998
    %1366 = vmatpush.bf16.msra.mxu0 %v995
    %1367 = vmatpush.bf16.msra.mxu0 %v992
    %1368 = vmatpush.bf16.msra.mxu0 %v989
    %1369 = vmatpush.bf16.msra.mxu0 %v986
    %1370 = vmatpush.bf16.msra.mxu0 %v983
    %1371 = vmatpush.bf16.msra.mxu0 %v980
    %1372 = vmatmul.bf16.gmra.mxu0 %v324
    %v1373 = vpop.f32.mrf.mxu0
    %v1374 = vadd.f32 %v294, %v1373
    %v1375 = vpop.f32.mrf.mxu0
    %v1376 = vadd.f32 %v294, %v1375
    %1377 = vdwg.mxu0
    %1378 = vmatpush.bf16.msra.mxu0 %v1025
    %1379 = vmatpush.bf16.msra.mxu0 %v1022
    %1380 = vmatpush.bf16.msra.mxu0 %v1019
    %1381 = vmatpush.bf16.msra.mxu0 %v1016
    %1382 = vmatpush.bf16.msra.mxu0 %v1013
    %1383 = vmatpush.bf16.msra.mxu0 %v1010
    %1384 = vmatpush.bf16.msra.mxu0 %v1007
    %1385 = vmatpush.bf16.msra.mxu0 %v1004
    %1386 = vmatmul.bf16.gmra.mxu0 %v325
    %v1387 = vpop.f32.mrf.mxu0
    %v1388 = vadd.f32 %v1374, %v1387
    %v1389 = vpop.f32.mrf.mxu0
    %v1390 = vadd.f32 %v1376, %v1389
    %1391 = vdwg.mxu0
    %1392 = vmatpush.bf16.msra.mxu0 %v1049
    %1393 = vmatpush.bf16.msra.mxu0 %v1046
    %1394 = vmatpush.bf16.msra.mxu0 %v1043
    %1395 = vmatpush.bf16.msra.mxu0 %v1040
    %1396 = vmatpush.bf16.msra.mxu0 %v1037
    %1397 = vmatpush.bf16.msra.mxu0 %v1034
    %1398 = vmatpush.bf16.msra.mxu0 %v1031
    %1399 = vmatpush.bf16.msra.mxu0 %v1028
    %1400 = vmatmul.bf16.gmra.mxu0 %v326
    %v1401 = vpop.f32.mrf.mxu0
    %v1402 = vadd.f32 %v1388, %v1401
    %v1403 = vpop.f32.mrf.mxu0
    %v1404 = vadd.f32 %v1390, %v1403
    %1405 = vdwg.mxu0
    %1406 = vmatpush.bf16.msra.mxu0 %v1073
    %1407 = vmatpush.bf16.msra.mxu0 %v1070
    %1408 = vmatpush.bf16.msra.mxu0 %v1067
    %1409 = vmatpush.bf16.msra.mxu0 %v1064
    %1410 = vmatpush.bf16.msra.mxu0 %v1061
    %1411 = vmatpush.bf16.msra.mxu0 %v1058
    %1412 = vmatpush.bf16.msra.mxu0 %v1055
    %1413 = vmatpush.bf16.msra.mxu0 %v1052
    %1414 = vmatmul.bf16.gmra.mxu0 %v327
    %v1415 = vpop.f32.mrf.mxu0
    %v1416 = vadd.f32 %v1402, %v1415
    %v1417 = vpop.f32.mrf.mxu0
    %v1418 = vadd.f32 %v1404, %v1417
    %1419 = vdwg.mxu0
    %1420 = vmatpush.bf16.msra.mxu0 %v1097
    %1421 = vmatpush.bf16.msra.mxu0 %v1094
    %1422 = vmatpush.bf16.msra.mxu0 %v1091
    %1423 = vmatpush.bf16.msra.mxu0 %v1088
    %1424 = vmatpush.bf16.msra.mxu0 %v1085
    %1425 = vmatpush.bf16.msra.mxu0 %v1082
    %1426 = vmatpush.bf16.msra.mxu0 %v1079
    %1427 = vmatpush.bf16.msra.mxu0 %v1076
    %1428 = vmatmul.bf16.gmra.mxu0 %v328
    %v1429 = vpop.f32.mrf.mxu0
    %v1430 = vadd.f32 %v1416, %v1429
    %v1431 = vpop.f32.mrf.mxu0
    %v1432 = vadd.f32 %v1418, %v1431
    %1433 = vdwg.mxu0
    %1434 = vmatpush.bf16.msra.mxu0 %v1121
    %1435 = vmatpush.bf16.msra.mxu0 %v1118
    %1436 = vmatpush.bf16.msra.mxu0 %v1115
    %1437 = vmatpush.bf16.msra.mxu0 %v1112
    %1438 = vmatpush.bf16.msra.mxu0 %v1109
    %1439 = vmatpush.bf16.msra.mxu0 %v1106
    %1440 = vmatpush.bf16.msra.mxu0 %v1103
    %1441 = vmatpush.bf16.msra.mxu0 %v1100
    %1442 = vmatmul.bf16.gmra.mxu0 %v329
    %v1443 = vpop.f32.mrf.mxu0
    %v1444 = vadd.f32 %v1430, %v1443
    %v1445 = vpop.f32.mrf.mxu0
    %v1446 = vadd.f32 %v1432, %v1445
    %1447 = vdwg.mxu0
    %1448 = vmatpush.bf16.msra.mxu0 %v1145
    %1449 = vmatpush.bf16.msra.mxu0 %v1142
    %1450 = vmatpush.bf16.msra.mxu0 %v1139
    %1451 = vmatpush.bf16.msra.mxu0 %v1136
    %1452 = vmatpush.bf16.msra.mxu0 %v1133
    %1453 = vmatpush.bf16.msra.mxu0 %v1130
    %1454 = vmatpush.bf16.msra.mxu0 %v1127
    %1455 = vmatpush.bf16.msra.mxu0 %v1124
    %1456 = vmatmul.bf16.gmra.mxu0 %v330
    %v1457 = vpop.f32.mrf.mxu0
    %v1458 = vadd.f32 %v1444, %v1457
    %v1459 = vpop.f32.mrf.mxu0
    %v1460 = vadd.f32 %v1446, %v1459
    %1461 = vdwg.mxu0
    %1462 = vmatpush.bf16.msra.mxu0 %v1169
    %1463 = vmatpush.bf16.msra.mxu0 %v1166
    %1464 = vmatpush.bf16.msra.mxu0 %v1163
    %1465 = vmatpush.bf16.msra.mxu0 %v1160
    %1466 = vmatpush.bf16.msra.mxu0 %v1157
    %1467 = vmatpush.bf16.msra.mxu0 %v1154
    %1468 = vmatpush.bf16.msra.mxu0 %v1151
    %1469 = vmatpush.bf16.msra.mxu0 %v1148
    %1470 = vmatmul.bf16.gmra.mxu0 %v331
    %v1471 = vpop.f32.mrf.mxu0
    %v1472 = vadd.f32 %v1458, %v1471
    %v1473 = vpop.f32.mrf.mxu0
    %v1474 = vadd.f32 %v1460, %v1473
    %1475 = vdwg.mxu0
    %1476 = vmatpush.bf16.msra.mxu0 %v1002
    %1477 = vmatpush.bf16.msra.mxu0 %v999
    %1478 = vmatpush.bf16.msra.mxu0 %v996
    %1479 = vmatpush.bf16.msra.mxu0 %v993
    %1480 = vmatpush.bf16.msra.mxu0 %v990
    %1481 = vmatpush.bf16.msra.mxu0 %v987
    %1482 = vmatpush.bf16.msra.mxu0 %v984
    %1483 = vmatpush.bf16.msra.mxu0 %v981
    %1484 = vmatmul.bf16.gmra.mxu0 %v324
    %v1485 = vpop.f32.mrf.mxu0
    %v1486 = vadd.f32 %v295, %v1485
    %v1487 = vpop.f32.mrf.mxu0
    %v1488 = vadd.f32 %v295, %v1487
    %1489 = vdwg.mxu0
    %1490 = vmatpush.bf16.msra.mxu0 %v1026
    %1491 = vmatpush.bf16.msra.mxu0 %v1023
    %1492 = vmatpush.bf16.msra.mxu0 %v1020
    %1493 = vmatpush.bf16.msra.mxu0 %v1017
    %1494 = vmatpush.bf16.msra.mxu0 %v1014
    %1495 = vmatpush.bf16.msra.mxu0 %v1011
    %1496 = vmatpush.bf16.msra.mxu0 %v1008
    %1497 = vmatpush.bf16.msra.mxu0 %v1005
    %1498 = vmatmul.bf16.gmra.mxu0 %v325
    %v1499 = vpop.f32.mrf.mxu0
    %v1500 = vadd.f32 %v1486, %v1499
    %v1501 = vpop.f32.mrf.mxu0
    %v1502 = vadd.f32 %v1488, %v1501
    %1503 = vdwg.mxu0
    %1504 = vmatpush.bf16.msra.mxu0 %v1050
    %1505 = vmatpush.bf16.msra.mxu0 %v1047
    %1506 = vmatpush.bf16.msra.mxu0 %v1044
    %1507 = vmatpush.bf16.msra.mxu0 %v1041
    %1508 = vmatpush.bf16.msra.mxu0 %v1038
    %1509 = vmatpush.bf16.msra.mxu0 %v1035
    %1510 = vmatpush.bf16.msra.mxu0 %v1032
    %1511 = vmatpush.bf16.msra.mxu0 %v1029
    %1512 = vmatmul.bf16.gmra.mxu0 %v326
    %v1513 = vpop.f32.mrf.mxu0
    %v1514 = vadd.f32 %v1500, %v1513
    %v1515 = vpop.f32.mrf.mxu0
    %v1516 = vadd.f32 %v1502, %v1515
    %1517 = vdwg.mxu0
    %1518 = vmatpush.bf16.msra.mxu0 %v1074
    %1519 = vmatpush.bf16.msra.mxu0 %v1071
    %1520 = vmatpush.bf16.msra.mxu0 %v1068
    %1521 = vmatpush.bf16.msra.mxu0 %v1065
    %1522 = vmatpush.bf16.msra.mxu0 %v1062
    %1523 = vmatpush.bf16.msra.mxu0 %v1059
    %1524 = vmatpush.bf16.msra.mxu0 %v1056
    %1525 = vmatpush.bf16.msra.mxu0 %v1053
    %1526 = vmatmul.bf16.gmra.mxu0 %v327
    %v1527 = vpop.f32.mrf.mxu0
    %v1528 = vadd.f32 %v1514, %v1527
    %v1529 = vpop.f32.mrf.mxu0
    %v1530 = vadd.f32 %v1516, %v1529
    %1531 = vdwg.mxu0
    %1532 = vmatpush.bf16.msra.mxu0 %v1098
    %1533 = vmatpush.bf16.msra.mxu0 %v1095
    %1534 = vmatpush.bf16.msra.mxu0 %v1092
    %1535 = vmatpush.bf16.msra.mxu0 %v1089
    %1536 = vmatpush.bf16.msra.mxu0 %v1086
    %1537 = vmatpush.bf16.msra.mxu0 %v1083
    %1538 = vmatpush.bf16.msra.mxu0 %v1080
    %1539 = vmatpush.bf16.msra.mxu0 %v1077
    %1540 = vmatmul.bf16.gmra.mxu0 %v328
    %v1541 = vpop.f32.mrf.mxu0
    %v1542 = vadd.f32 %v1528, %v1541
    %v1543 = vpop.f32.mrf.mxu0
    %v1544 = vadd.f32 %v1530, %v1543
    %1545 = vdwg.mxu0
    %1546 = vmatpush.bf16.msra.mxu0 %v1122
    %1547 = vmatpush.bf16.msra.mxu0 %v1119
    %1548 = vmatpush.bf16.msra.mxu0 %v1116
    %1549 = vmatpush.bf16.msra.mxu0 %v1113
    %1550 = vmatpush.bf16.msra.mxu0 %v1110
    %1551 = vmatpush.bf16.msra.mxu0 %v1107
    %1552 = vmatpush.bf16.msra.mxu0 %v1104
    %1553 = vmatpush.bf16.msra.mxu0 %v1101
    %1554 = vmatmul.bf16.gmra.mxu0 %v329
    %v1555 = vpop.f32.mrf.mxu0
    %v1556 = vadd.f32 %v1542, %v1555
    %v1557 = vpop.f32.mrf.mxu0
    %v1558 = vadd.f32 %v1544, %v1557
    %1559 = vdwg.mxu0
    %1560 = vmatpush.bf16.msra.mxu0 %v1146
    %1561 = vmatpush.bf16.msra.mxu0 %v1143
    %1562 = vmatpush.bf16.msra.mxu0 %v1140
    %1563 = vmatpush.bf16.msra.mxu0 %v1137
    %1564 = vmatpush.bf16.msra.mxu0 %v1134
    %1565 = vmatpush.bf16.msra.mxu0 %v1131
    %1566 = vmatpush.bf16.msra.mxu0 %v1128
    %1567 = vmatpush.bf16.msra.mxu0 %v1125
    %1568 = vmatmul.bf16.gmra.mxu0 %v330
    %v1569 = vpop.f32.mrf.mxu0
    %v1570 = vadd.f32 %v1556, %v1569
    %v1571 = vpop.f32.mrf.mxu0
    %v1572 = vadd.f32 %v1558, %v1571
    %1573 = vdwg.mxu0
    %1574 = vmatpush.bf16.msra.mxu0 %v1170
    %1575 = vmatpush.bf16.msra.mxu0 %v1167
    %1576 = vmatpush.bf16.msra.mxu0 %v1164
    %1577 = vmatpush.bf16.msra.mxu0 %v1161
    %1578 = vmatpush.bf16.msra.mxu0 %v1158
    %1579 = vmatpush.bf16.msra.mxu0 %v1155
    %1580 = vmatpush.bf16.msra.mxu0 %v1152
    %1581 = vmatpush.bf16.msra.mxu0 %v1149
    %1582 = vmatmul.bf16.gmra.mxu0 %v331
    %v1583 = vpop.f32.mrf.mxu0
    %v1584 = vadd.f32 %v1570, %v1583
    %v1585 = vpop.f32.mrf.mxu0
    %v1586 = vadd.f32 %v1572, %v1585
    %1587 = vdwg.mxu0
    %1588 = vmatpush.bf16.msra.mxu0 %v1003
    %1589 = vmatpush.bf16.msra.mxu0 %v1000
    %1590 = vmatpush.bf16.msra.mxu0 %v997
    %1591 = vmatpush.bf16.msra.mxu0 %v994
    %1592 = vmatpush.bf16.msra.mxu0 %v991
    %1593 = vmatpush.bf16.msra.mxu0 %v988
    %1594 = vmatpush.bf16.msra.mxu0 %v985
    %1595 = vmatpush.bf16.msra.mxu0 %v982
    %1596 = vmatmul.bf16.gmra.mxu0 %v324
    %v1597 = vpop.f32.mrf.mxu0
    %v1598 = vadd.f32 %v296, %v1597
    %v1599 = vpop.f32.mrf.mxu0
    %v1600 = vadd.f32 %v296, %v1599
    %1601 = vdwg.mxu0
    %1602 = vmatpush.bf16.msra.mxu0 %v1027
    %1603 = vmatpush.bf16.msra.mxu0 %v1024
    %1604 = vmatpush.bf16.msra.mxu0 %v1021
    %1605 = vmatpush.bf16.msra.mxu0 %v1018
    %1606 = vmatpush.bf16.msra.mxu0 %v1015
    %1607 = vmatpush.bf16.msra.mxu0 %v1012
    %1608 = vmatpush.bf16.msra.mxu0 %v1009
    %1609 = vmatpush.bf16.msra.mxu0 %v1006
    %1610 = vmatmul.bf16.gmra.mxu0 %v325
    %v1611 = vpop.f32.mrf.mxu0
    %v1612 = vadd.f32 %v1598, %v1611
    %v1613 = vpop.f32.mrf.mxu0
    %v1614 = vadd.f32 %v1600, %v1613
    %1615 = vdwg.mxu0
    %1616 = vmatpush.bf16.msra.mxu0 %v1051
    %1617 = vmatpush.bf16.msra.mxu0 %v1048
    %1618 = vmatpush.bf16.msra.mxu0 %v1045
    %1619 = vmatpush.bf16.msra.mxu0 %v1042
    %1620 = vmatpush.bf16.msra.mxu0 %v1039
    %1621 = vmatpush.bf16.msra.mxu0 %v1036
    %1622 = vmatpush.bf16.msra.mxu0 %v1033
    %1623 = vmatpush.bf16.msra.mxu0 %v1030
    %1624 = vmatmul.bf16.gmra.mxu0 %v326
    %v1625 = vpop.f32.mrf.mxu0
    %v1626 = vadd.f32 %v1612, %v1625
    %v1627 = vpop.f32.mrf.mxu0
    %v1628 = vadd.f32 %v1614, %v1627
    %1629 = vdwg.mxu0
    %1630 = vmatpush.bf16.msra.mxu0 %v1075
    %1631 = vmatpush.bf16.msra.mxu0 %v1072
    %1632 = vmatpush.bf16.msra.mxu0 %v1069
    %1633 = vmatpush.bf16.msra.mxu0 %v1066
    %1634 = vmatpush.bf16.msra.mxu0 %v1063
    %1635 = vmatpush.bf16.msra.mxu0 %v1060
    %1636 = vmatpush.bf16.msra.mxu0 %v1057
    %1637 = vmatpush.bf16.msra.mxu0 %v1054
    %1638 = vmatmul.bf16.gmra.mxu0 %v327
    %v1639 = vpop.f32.mrf.mxu0
    %v1640 = vadd.f32 %v1626, %v1639
    %v1641 = vpop.f32.mrf.mxu0
    %v1642 = vadd.f32 %v1628, %v1641
    %1643 = vdwg.mxu0
    %1644 = vmatpush.bf16.msra.mxu0 %v1099
    %1645 = vmatpush.bf16.msra.mxu0 %v1096
    %1646 = vmatpush.bf16.msra.mxu0 %v1093
    %1647 = vmatpush.bf16.msra.mxu0 %v1090
    %1648 = vmatpush.bf16.msra.mxu0 %v1087
    %1649 = vmatpush.bf16.msra.mxu0 %v1084
    %1650 = vmatpush.bf16.msra.mxu0 %v1081
    %1651 = vmatpush.bf16.msra.mxu0 %v1078
    %1652 = vmatmul.bf16.gmra.mxu0 %v328
    %v1653 = vpop.f32.mrf.mxu0
    %v1654 = vadd.f32 %v1640, %v1653
    %v1655 = vpop.f32.mrf.mxu0
    %v1656 = vadd.f32 %v1642, %v1655
    %1657 = vdwg.mxu0
    %1658 = vmatpush.bf16.msra.mxu0 %v1123
    %1659 = vmatpush.bf16.msra.mxu0 %v1120
    %1660 = vmatpush.bf16.msra.mxu0 %v1117
    %1661 = vmatpush.bf16.msra.mxu0 %v1114
    %1662 = vmatpush.bf16.msra.mxu0 %v1111
    %1663 = vmatpush.bf16.msra.mxu0 %v1108
    %1664 = vmatpush.bf16.msra.mxu0 %v1105
    %1665 = vmatpush.bf16.msra.mxu0 %v1102
    %1666 = vmatmul.bf16.gmra.mxu0 %v329
    %v1667 = vpop.f32.mrf.mxu0
    %v1668 = vadd.f32 %v1654, %v1667
    %v1669 = vpop.f32.mrf.mxu0
    %v1670 = vadd.f32 %v1656, %v1669
    %1671 = vdwg.mxu0
    %1672 = vmatpush.bf16.msra.mxu0 %v1147
    %1673 = vmatpush.bf16.msra.mxu0 %v1144
    %1674 = vmatpush.bf16.msra.mxu0 %v1141
    %1675 = vmatpush.bf16.msra.mxu0 %v1138
    %1676 = vmatpush.bf16.msra.mxu0 %v1135
    %1677 = vmatpush.bf16.msra.mxu0 %v1132
    %1678 = vmatpush.bf16.msra.mxu0 %v1129
    %1679 = vmatpush.bf16.msra.mxu0 %v1126
    %1680 = vmatmul.bf16.gmra.mxu0 %v330
    %v1681 = vpop.f32.mrf.mxu0
    %v1682 = vadd.f32 %v1668, %v1681
    %v1683 = vpop.f32.mrf.mxu0
    %v1684 = vadd.f32 %v1670, %v1683
    %1685 = vdwg.mxu0
    %1686 = vmatpush.bf16.msra.mxu0 %v1171
    %1687 = vmatpush.bf16.msra.mxu0 %v1168
    %1688 = vmatpush.bf16.msra.mxu0 %v1165
    %1689 = vmatpush.bf16.msra.mxu0 %v1162
    %1690 = vmatpush.bf16.msra.mxu0 %v1159
    %1691 = vmatpush.bf16.msra.mxu0 %v1156
    %1692 = vmatpush.bf16.msra.mxu0 %v1153
    %1693 = vmatpush.bf16.msra.mxu0 %v1150
    %1694 = vmatmul.bf16.gmra.mxu0 %v331
    %v1695 = vpop.f32.mrf.mxu0
    %v1696 = vadd.f32 %v1682, %v1695
    %v1697 = vpop.f32.mrf.mxu0
    %v1698 = vadd.f32 %v1684, %v1697
    %1699 = vdwg.mxu0
    %v1700 = vpack.c.bf16 %v1474, %v1472
    %v1701 = vpack.c.bf16 %v1586, %v1584
    %v1702 = vpack.c.bf16 %v1698, %v1696
    %v1703 = vld [vmem:[%s4] sm:$0xf]
    %v1704 = vld [vmem:[%s4 + $0x4] sm:$0xf]
    %v1705 = vld [vmem:[%s4 + $0x8] sm:$0xf]
    %v1706 = vld [vmem:[%s4 + $0xc] sm:$0xf]
    %v1707 = vld [vmem:[%s4 + $0x10] sm:$0xf]
    %v1708 = vld [vmem:[%s4 + $0x14] sm:$0xf]
    %v1709 = vld [vmem:[%s4 + $0x18] sm:$0xf]
    %v1710 = vld [vmem:[%s4 + $0x1c] sm:$0xf]
    %v1711 = vld [vmem:[%s4 + $0x20] sm:$0xf]
    %v1712 = vld [vmem:[%s4 + $0x24] sm:$0xf]
    %v1713 = vld [vmem:[%s4 + $0x28] sm:$0xf]
    %v1714 = vld [vmem:[%s4 + $0x2c] sm:$0xf]
    %v1715 = vld [vmem:[%s4 + $0x30] sm:$0xf]
    %v1716 = vld [vmem:[%s4 + $0x34] sm:$0xf]
    %v1717 = vld [vmem:[%s4 + $0x38] sm:$0xf]
    %v1718 = vld [vmem:[%s4 + $0x3c] sm:$0xf]
    %v1719 = vld [vmem:[%s4 + $0x40] sm:$0xf]
    %v1720 = vld [vmem:[%s4 + $0x44] sm:$0xf]
    %v1721 = vld [vmem:[%s4 + $0x48] sm:$0xf]
    %v1722 = vld [vmem:[%s4 + $0x4c] sm:$0xf]
    %v1723 = vld [vmem:[%s4 + $0x50] sm:$0xf]
    %v1724 = vld [vmem:[%s4 + $0x54] sm:$0xf]
    %v1725 = vld [vmem:[%s4 + $0x58] sm:$0xf]
    %v1726 = vld [vmem:[%s4 + $0x5c] sm:$0xf]
    %v1727 = vld [vmem:[%s4 + $0x60] sm:$0xf]
    %v1728 = vld [vmem:[%s4 + $0x64] sm:$0xf]
    %v1729 = vld [vmem:[%s4 + $0x68] sm:$0xf]
    %v1730 = vld [vmem:[%s4 + $0x6c] sm:$0xf]
    %v1731 = vld [vmem:[%s4 + $0x70] sm:$0xf]
    %v1732 = vld [vmem:[%s4 + $0x74] sm:$0xf]
    %v1733 = vld [vmem:[%s4 + $0x78] sm:$0xf]
    %v1734 = vld [vmem:[%s4 + $0x7c] sm:$0xf]
    %v1735 = vld [vmem:[%s4 + $0x80] sm:$0xf]
    %v1736 = vld [vmem:[%s4 + $0x84] sm:$0xf]
    %v1737 = vld [vmem:[%s4 + $0x88] sm:$0xf]
    %v1738 = vld [vmem:[%s4 + $0x8c] sm:$0xf]
    %v1739 = vld [vmem:[%s4 + $0x90] sm:$0xf]
    %v1740 = vld [vmem:[%s4 + $0x94] sm:$0x3]
    %v1741 = vld [vmem:[%s1] sm:$0xff]
    %v1742 = vld [vmem:[%s1 + $0x8] sm:$0xf]
    %v1743 = vld [vmem:[%s1 + $0xc] sm:$0xff]
    %v1744 = vld [vmem:[%s1 + $0x14] sm:$0xf]
    %v1745 = vld [vmem:[%s5] sm:$0xf]
    %v1746 = vld [vmem:[%s5 + $0x4] sm:$0xf]
    %v1747 = vld [vmem:[%s5 + $0x8] sm:$0xf]
    %v1748 = vld [vmem:[%s5 + $0xc] sm:$0xf]
    %v1749 = vld [vmem:[%s5 + $0x10] sm:$0xf]
    %v1750 = vld [vmem:[%s5 + $0x14] sm:$0xf]
    %v1751 = vld [vmem:[%s5 + $0x18] sm:$0xf]
    %v1752 = vld [vmem:[%s5 + $0x1c] sm:$0xf]
    %v1753 = vld [vmem:[%s5 + $0x20] sm:$0xf]
    %v1754 = vld [vmem:[%s5 + $0x24] sm:$0xf]
    %v1755 = vld [vmem:[%s5 + $0x28] sm:$0xf]
    %v1756 = vld [vmem:[%s5 + $0x2c] sm:$0xf]
    %v1757 = vld [vmem:[%s5 + $0x30] sm:$0xf]
    %v1758 = vld [vmem:[%s5 + $0x34] sm:$0xf]
    %v1759 = vld [vmem:[%s5 + $0x38] sm:$0xf]
    %v1760 = vld [vmem:[%s5 + $0x3c] sm:$0xf]
    %v1761 = vld [vmem:[%s5 + $0x40] sm:$0xf]
    %v1762 = vld [vmem:[%s5 + $0x44] sm:$0xf]
    %v1763 = vld [vmem:[%s5 + $0x48] sm:$0xf]
    %v1764 = vld [vmem:[%s5 + $0x4c] sm:$0xf]
    %v1765 = vld [vmem:[%s5 + $0x50] sm:$0xf]
    %v1766 = vld [vmem:[%s5 + $0x54] sm:$0xf]
    %v1767 = vld [vmem:[%s5 + $0x58] sm:$0xf]
    %v1768 = vld [vmem:[%s5 + $0x5c] sm:$0xf]
    %v1769 = vld [vmem:[%s5 + $0x60] sm:$0xf]
    %v1770 = vld [vmem:[%s5 + $0x64] sm:$0xf]
    %v1771 = vld [vmem:[%s5 + $0x68] sm:$0xf]
    %v1772 = vld [vmem:[%s5 + $0x6c] sm:$0xf]
    %v1773 = vld [vmem:[%s5 + $0x70] sm:$0xf]
    %v1774 = vld [vmem:[%s5 + $0x74] sm:$0xf]
    %v1775 = vld [vmem:[%s5 + $0x78] sm:$0xf]
    %v1776 = vld [vmem:[%s5 + $0x7c] sm:$0xf]
    %v1777 = vld [vmem:[%s5 + $0x80] sm:$0xf]
    %v1778 = vld [vmem:[%s5 + $0x84] sm:$0xf]
    %v1779 = vld [vmem:[%s5 + $0x88] sm:$0xf]
    %v1780 = vld [vmem:[%s5 + $0x8c] sm:$0xf]
    %v1781 = vld [vmem:[%s5 + $0x90] sm:$0xf]
    %v1782 = vld [vmem:[%s5 + $0x94] sm:$0x3]
    %v1787 = vunpack.c.l.b16 %v1741
    %v1788 = vunpack.c.h.b16 %v1741
    %v1789 = vunpack.c.l.b16 %v1742
    %v1790 = vunpack.c.l.b16 %v1743
    %v1791 = vunpack.c.h.b16 %v1743
    %v1792 = vunpack.c.l.b16 %v1744
    %v1793 = vpack.c.b16 %v1790, %v1787
    %v1794 = vpack.c.b16 %v1791, %v1788
    %v1795 = vpack.c.b16 %v1792, %v1789
    %v1836 = vunpack.c.l.b16 %v1745
    %v1837 = vunpack.c.l.b16 %v1746
    %v1838 = vunpack.c.l.b16 %v1747
    %v1839 = vunpack.c.l.b16 %v1748
    %v1840 = vunpack.c.l.b16 %v1749
    %v1841 = vunpack.c.l.b16 %v1750
    %v1842 = vunpack.c.l.b16 %v1751
    %v1843 = vunpack.c.l.b16 %v1752
    %v1844 = vunpack.c.l.b16 %v1753
    %v1845 = vunpack.c.l.b16 %v1754
    %v1846 = vunpack.c.l.b16 %v1755
    %v1847 = vunpack.c.l.b16 %v1756
    %v1848 = vunpack.c.l.b16 %v1757
    %v1849 = vunpack.c.l.b16 %v1758
    %v1850 = vunpack.c.l.b16 %v1759
    %v1851 = vunpack.c.l.b16 %v1760
    %v1852 = vunpack.c.l.b16 %v1761
    %v1853 = vunpack.c.l.b16 %v1762
    %v1854 = vunpack.c.l.b16 %v1763
    %v1855 = vunpack.c.l.b16 %v1764
    %v1856 = vunpack.c.l.b16 %v1765
    %v1857 = vunpack.c.l.b16 %v1766
    %v1858 = vunpack.c.l.b16 %v1767
    %v1859 = vunpack.c.l.b16 %v1768
    %v1860 = vunpack.c.l.b16 %v1769
    %v1861 = vunpack.c.l.b16 %v1770
    %v1862 = vunpack.c.l.b16 %v1771
    %v1863 = vunpack.c.l.b16 %v1772
    %v1864 = vunpack.c.l.b16 %v1773
    %v1865 = vunpack.c.l.b16 %v1774
    %v1866 = vunpack.c.l.b16 %v1775
    %v1867 = vunpack.c.l.b16 %v1776
    %v1868 = vunpack.c.l.b16 %v1777
    %v1869 = vunpack.c.l.b16 %v1778
    %v1870 = vunpack.c.l.b16 %v1779
    %v1871 = vunpack.c.l.b16 %v1780
    %v1872 = vunpack.c.l.b16 %v1781
    %v1873 = vunpack.c.l.b16 %v1782
    %v1874 = vpack.c.b16 %v1837, %v1836
    %v1875 = vpack.c.b16 %v1839, %v1838
    %v1876 = vpack.c.b16 %v1841, %v1840
    %v1877 = vpack.c.b16 %v1843, %v1842
    %v1878 = vpack.c.b16 %v1845, %v1844
    %v1879 = vpack.c.b16 %v1847, %v1846
    %v1880 = vpack.c.b16 %v1849, %v1848
    %v1881 = vpack.c.b16 %v1851, %v1850
    %v1882 = vpack.c.b16 %v1853, %v1852
    %v1883 = vpack.c.b16 %v1855, %v1854
    %v1884 = vpack.c.b16 %v1857, %v1856
    %v1885 = vpack.c.b16 %v1859, %v1858
    %v1886 = vpack.c.b16 %v1861, %v1860
    %v1887 = vpack.c.b16 %v1863, %v1862
    %v1888 = vpack.c.b16 %v1865, %v1864
    %v1889 = vpack.c.b16 %v1867, %v1866
    %v1890 = vpack.c.b16 %v1869, %v1868
    %v1891 = vpack.c.b16 %v1871, %v1870
    %v1892 = vpack.c.b16 %v1873, %v1872
    %vm1911 = vcmask 359424
    %v1913 = vsel %vm1911, %v1795, 0
    %vm1915 = vcmask 1045504
    %v1917 = vsel %vm1915, %v1892, 0
    %1919 = vmatpush.bf16.msra.mxu0 %v1881
    %1920 = vmatpush.bf16.msra.mxu0 %v1880
    %1921 = vmatpush.bf16.msra.mxu0 %v1879
    %1922 = vmatpush.bf16.msra.mxu0 %v1878
    %1923 = vmatpush.bf16.msra.mxu0 %v1877
    %1924 = vmatpush.bf16.msra.mxu0 %v1876
    %1925 = vmatpush.bf16.msra.mxu0 %v1875
    %1926 = vmatpush.bf16.msra.mxu0 %v1874
    %1927 = vmatmul.bf16.gmra.mxu0 %v1793
    %v1928 = vpop.f32.mrf.mxu0
    %v1929 = vadd.f32 0.0, %v1928
    %v1930 = vpop.f32.mrf.mxu0
    %v1931 = vadd.f32 0.0, %v1930
    %1932 = vdwg.mxu0
    %1933 = vmatpush.bf16.msra.mxu0 %v1889
    %1934 = vmatpush.bf16.msra.mxu0 %v1888
    %1935 = vmatpush.bf16.msra.mxu0 %v1887
    %1936 = vmatpush.bf16.msra.mxu0 %v1886
    %1937 = vmatpush.bf16.msra.mxu0 %v1885
    %1938 = vmatpush.bf16.msra.mxu0 %v1884
    %1939 = vmatpush.bf16.msra.mxu0 %v1883
    %1940 = vmatpush.bf16.msra.mxu0 %v1882
    %1941 = vmatmul.bf16.gmra.mxu0 %v1794
    %v1942 = vpop.f32.mrf.mxu0
    %v1943 = vadd.f32 %v1929, %v1942
    %v1944 = vpop.f32.mrf.mxu0
    %v1945 = vadd.f32 %v1931, %v1944
    %1946 = vdwg.mxu0
    %1947 = vmatpush.bf16.msra.mxu0 0
    %1948 = vmatpush.bf16.msra.mxu0 0
    %1949 = vmatpush.bf16.msra.mxu0 0
    %1950 = vmatpush.bf16.msra.mxu0 0
    %1951 = vmatpush.bf16.msra.mxu0 0
    %1952 = vmatpush.bf16.msra.mxu0 %v1917
    %1953 = vmatpush.bf16.msra.mxu0 %v1891
    %1954 = vmatpush.bf16.msra.mxu0 %v1890
    %1955 = vmatmul.bf16.gmra.mxu0 %v1913
    %v1956 = vpop.f32.mrf.mxu0
    %v1957 = vadd.f32 %v1943, %v1956
    %v1958 = vpop.f32.mrf.mxu0
    %v1959 = vadd.f32 %v1945, %v1958
    %1960 = vdwg.mxu0
    %v1999 = vunpack.c.l.b16 %v1703
    %v2000 = vunpack.c.l.b16 %v1704
    %v2001 = vunpack.c.l.b16 %v1705
    %v2002 = vunpack.c.l.b16 %v1706
    %v2003 = vunpack.c.l.b16 %v1707
    %v2004 = vunpack.c.l.b16 %v1708
    %v2005 = vunpack.c.l.b16 %v1709
    %v2006 = vunpack.c.l.b16 %v1710
    %v2007 = vunpack.c.l.b16 %v1711
    %v2008 = vunpack.c.l.b16 %v1712
    %v2009 = vunpack.c.l.b16 %v1713
    %v2010 = vunpack.c.l.b16 %v1714
    %v2011 = vunpack.c.l.b16 %v1715
    %v2012 = vunpack.c.l.b16 %v1716
    %v2013 = vunpack.c.l.b16 %v1717
    %v2014 = vunpack.c.l.b16 %v1718
    %v2015 = vunpack.c.l.b16 %v1719
    %v2016 = vunpack.c.l.b16 %v1720
    %v2017 = vunpack.c.l.b16 %v1721
    %v2018 = vunpack.c.l.b16 %v1722
    %v2019 = vunpack.c.l.b16 %v1723
    %v2020 = vunpack.c.l.b16 %v1724
    %v2021 = vunpack.c.l.b16 %v1725
    %v2022 = vunpack.c.l.b16 %v1726
    %v2023 = vunpack.c.l.b16 %v1727
    %v2024 = vunpack.c.l.b16 %v1728
    %v2025 = vunpack.c.l.b16 %v1729
    %v2026 = vunpack.c.l.b16 %v1730
    %v2027 = vunpack.c.l.b16 %v1731
    %v2028 = vunpack.c.l.b16 %v1732
    %v2029 = vunpack.c.l.b16 %v1733
    %v2030 = vunpack.c.l.b16 %v1734
    %v2031 = vunpack.c.l.b16 %v1735
    %v2032 = vunpack.c.l.b16 %v1736
    %v2033 = vunpack.c.l.b16 %v1737
    %v2034 = vunpack.c.l.b16 %v1738
    %v2035 = vunpack.c.l.b16 %v1739
    %v2036 = vunpack.c.l.b16 %v1740
    %v2037 = vpack.c.b16 %v2000, %v1999
    %v2038 = vpack.c.b16 %v2002, %v2001
    %v2039 = vpack.c.b16 %v2004, %v2003
    %v2040 = vpack.c.b16 %v2006, %v2005
    %v2041 = vpack.c.b16 %v2008, %v2007
    %v2042 = vpack.c.b16 %v2010, %v2009
    %v2043 = vpack.c.b16 %v2012, %v2011
    %v2044 = vpack.c.b16 %v2014, %v2013
    %v2045 = vpack.c.b16 %v2016, %v2015
    %v2046 = vpack.c.b16 %v2018, %v2017
    %v2047 = vpack.c.b16 %v2020, %v2019
    %v2048 = vpack.c.b16 %v2022, %v2021
    %v2049 = vpack.c.b16 %v2024, %v2023
    %v2050 = vpack.c.b16 %v2026, %v2025
    %v2051 = vpack.c.b16 %v2028, %v2027
    %v2052 = vpack.c.b16 %v2030, %v2029
    %v2053 = vpack.c.b16 %v2032, %v2031
    %v2054 = vpack.c.b16 %v2034, %v2033
    %v2055 = vpack.c.b16 %v2036, %v2035
    %v2075 = vsel %vm1911, %v1702, 0
    %v2078 = vsel %vm1915, %v2055, 0
    %2080 = vmatpush.bf16.msra.mxu0 %v2044
    %2081 = vmatpush.bf16.msra.mxu0 %v2043
    %2082 = vmatpush.bf16.msra.mxu0 %v2042
    %2083 = vmatpush.bf16.msra.mxu0 %v2041
    %2084 = vmatpush.bf16.msra.mxu0 %v2040
    %2085 = vmatpush.bf16.msra.mxu0 %v2039
    %2086 = vmatpush.bf16.msra.mxu0 %v2038
    %2087 = vmatpush.bf16.msra.mxu0 %v2037
    %2088 = vmatmul.bf16.gmra.mxu0 %v1700
    %v2089 = vpop.f32.mrf.mxu0
    %v2090 = vadd.f32 %v1957, %v2089
    %v2091 = vpop.f32.mrf.mxu0
    %v2092 = vadd.f32 %v1959, %v2091
    %2093 = vdwg.mxu0
    %2094 = vmatpush.bf16.msra.mxu0 %v2052
    %2095 = vmatpush.bf16.msra.mxu0 %v2051
    %2096 = vmatpush.bf16.msra.mxu0 %v2050
    %2097 = vmatpush.bf16.msra.mxu0 %v2049
    %2098 = vmatpush.bf16.msra.mxu0 %v2048
    %2099 = vmatpush.bf16.msra.mxu0 %v2047
    %2100 = vmatpush.bf16.msra.mxu0 %v2046
    %2101 = vmatpush.bf16.msra.mxu0 %v2045
    %2102 = vmatmul.bf16.gmra.mxu0 %v1701
    %v2103 = vpop.f32.mrf.mxu0
    %v2104 = vadd.f32 %v2090, %v2103
    %v2105 = vpop.f32.mrf.mxu0
    %v2106 = vadd.f32 %v2092, %v2105
    %2107 = vdwg.mxu0
    %2108 = vmatpush.bf16.msra.mxu0 0
    %2109 = vmatpush.bf16.msra.mxu0 0
    %2110 = vmatpush.bf16.msra.mxu0 0
    %2111 = vmatpush.bf16.msra.mxu0 0
    %2112 = vmatpush.bf16.msra.mxu0 0
    %2113 = vmatpush.bf16.msra.mxu0 %v2078
    %2114 = vmatpush.bf16.msra.mxu0 %v2054
    %2115 = vmatpush.bf16.msra.mxu0 %v2053
    %2116 = vmatmul.bf16.gmra.mxu0 %v2075
    %v2117 = vpop.f32.mrf.mxu0
    %v2118 = vadd.f32 %v2104, %v2117
    %v2119 = vpop.f32.mrf.mxu0
    %v2120 = vadd.f32 %v2106, %v2119
    %2121 = vdwg.mxu0
    %v2122 = vld [vmem:[%s6] sm:$0x1]
    %v2124 = vperm.slane %v2122, 0
    %v2126 = vadd.f32 %v2118, %v2124
    %v2127 = vadd.f32 %v2120, %v2124
    %v2128 = vmax.f32 %v2126, 0.0
    %v2129 = vmax.f32 %v2127, 0.0
    %v2130 = vlaneseq
    %v2131 = vand.u32 %v2130, 127
    %vm2132 = vcmp.lt.s32.totalorder %v2131, 40
    %v2133 = vsel %vm2132, %v2128, -1e+30
    %v2134 = vsel %vm2132, %v2129, -1e+30
    %2135 = vmax.xlane.f32.xlu0 %v2133
    %v2136 = vpop.xlane.xlu0 %2135
    %2137 = vmax.xlane.f32.xlu0 %v2134
    %v2138 = vpop.xlane.xlu0 %2137
    %v2139 = vsub.f32 %v2133, %v2136
    %v2140 = vsub.f32 %v2134, %v2138
    %v2141 = vmul.f32 %v2139, 1.442695
    %v2142 = vpow.pop %v2141
    %v2143 = vmul.f32 %v2140, 1.442695
    %v2144 = vpow.pop %v2143
    %2145 = vadd.xlane.f32.xlu0 %v2142
    %v2146 = vpop.xlane.xlu0 %2145
    %2147 = vadd.xlane.f32.xlu0 %v2144
    %v2148 = vpop.xlane.xlu0 %2147
    %v2149 = vlog2.pop %v2146
    %v2150 = vmul.f32 %v2149, 0.6931472
    %v2151 = vlog2.pop %v2148
    %v2152 = vmul.f32 %v2151, 0.6931472
    %v2153 = vsub.f32 %v2139, %v2150
    %v2154 = vsub.f32 %v2140, %v2152
    %2155 = vst [vmem:[#allocation2] sm:$0xff] %v2153
    %2156 = vst [vmem:[#allocation2 + $0x8] sm:$0xff] %v2154
    // Predicated region
    $region30: #{tpu_custom_call.1} parent=1 // pred_check
      _
    $region31: #{tpu_custom_call.1} parent=1 // pred_check_branch
      %2158 = sbr.rel (0) target = $region33
    $region32: #{tpu_custom_call.1} parent=1 // pred_region
      %2160 = vsyncadd [#allocation3], 0
      %s2161 = sshll.u32 [#allocation2], 4
      %s2162 = int_to_ptr.vmem [resolvable:$true] %s2161
      %s2163 = sshll.u32 %s7, 4
      %s2164 = int_to_ptr.hbm [resolvable:$true] %s2163
      %2169 = dma.vmem_to_hbm [thread:$0]  %s2162, 256, %s2164, [#allocation3], 128, 128, 8
    $region33: #{tpu_custom_call.1} parent=1 // pred_fallthru
      _
    // Predicated region
    $region34: #{tpu_custom_call.1} parent=1 // pred_check
      _
    $region35: #{tpu_custom_call.1} parent=1 // pred_check_branch
      %2171 = sbr.rel (0) target = $region37
    $region36: #{tpu_custom_call.1} parent=1 // pred_region
      %2173 = dma.done [#allocation3], 256
    $region37: #{tpu_custom_call.1} parent=1 // pred_fallthru
      _
    %2174 = vsyncpa [#allocation3], 1

</llo_original>
